<compile_context>
chip_gen: v7x
topology: tpu7x:2x2x1
jax: 0.10.0
libtpu: 0.0.40
codegen_flags: <defaults>
</compile_context>

<pallas_src>
import math
from functools import partial

import jax
import jax.numpy as jnp
from jax.experimental import pallas as pl
from jax.experimental.pallas import tpu as pltpu


# --------------------------------------------------------------------------
# helpers
# --------------------------------------------------------------------------
def _layer_norm(x, g, b, eps):
    mu = jnp.mean(x, axis=-1, keepdims=True)
    var = jnp.mean(jnp.square(x - mu), axis=-1, keepdims=True)
    return (x - mu) * jax.lax.rsqrt(var + eps) * g + b


def _const_spec(shape):
    """Grid-invariant (weight) block: whole array, single-buffered."""
    return pl.BlockSpec(shape, lambda *_: (0,) * len(shape),
                        pipeline_mode=pl.Buffered(1))


def _vmem_limit(estimate_bytes):
    # 2x headroom for layout padding / compiler scratch, capped below v7x's
    # 64 MiB physical VMEM (v5e / v6e have 128 MiB, so 48 MiB is always safe).
    return int(min(48 * 2**20, max(32 * 2**20, 2 * estimate_bytes)))


def _pick_block(n, target):
    b = min(n, target)
    while n % b:
        b -= 1
    return b


# --------------------------------------------------------------------------
# pass 1: LN1 + pos + Q/K/V projection, emitted head-split in bf16
# --------------------------------------------------------------------------
def _qkv_proj_kernel(src_ref, pos_ref, ln1_g_ref, ln1_b_ref,
                     wq_ref, wk_ref, wv_ref, bq_ref, bk_ref, bv_ref,
                     q_ref, k_ref, v_ref, *, nhead, eps):
    f32, bf16 = jnp.float32, jnp.bfloat16
    E = wq_ref.shape[0]
    Dh = E // nhead

    x = src_ref[0].astype(f32)
    xn = _layer_norm(x, ln1_g_ref[0], ln1_b_ref[0], eps)      # src2 (value input)
    qk_in = (xn + pos_ref[0].astype(f32)).astype(bf16)        # q = k = src2 + pos
    v_in = xn.astype(bf16)

    def proj(x_bf, w_ref, b_ref):
        # weights pre-transposed + bf16 in the wrapper; f32 accumulation.
        return jnp.dot(x_bf, w_ref[...], preferred_element_type=f32) + b_ref[0]

    def split_heads(t):                                        # (t, E) -> (H, t, Dh)
        return jnp.transpose(t.reshape(t.shape[0], nhead, Dh), (1, 0, 2))

    # wq / bq already carry the 1/sqrt(Dh) attention scale (folded in wrapper).
    q_ref[0] = split_heads(proj(qk_in, wq_ref, bq_ref)).astype(bf16)
    k_ref[0] = split_heads(proj(qk_in, wk_ref, bk_ref)).astype(bf16)
    v_ref[0] = split_heads(proj(v_in, wv_ref, bv_ref)).astype(bf16)


def _qkv_projection(src_b, pos_b, kp, *, nhead, block):
    N, L, E = src_b.shape
    Dh = E // nhead
    grid = (N, L // block)
    seq_spec = pl.BlockSpec((1, block, E), lambda b, s: (b, s, 0))
    head_spec = pl.BlockSpec((1, nhead, block, Dh), lambda b, s: (b, 0, s, 0))
    out_sds = jax.ShapeDtypeStruct((N, nhead, L, Dh), jnp.bfloat16)

    est = (2 * 3 * E * E + 4 * 5 * E                     # bf16 weights + f32 vecs
           + 2 * 2 * block * E * 4 * 2                   # src/pos double-buffered
           + 2 * 3 * nhead * block * Dh * 2              # q/k/v double-buffered
           + 8 * block * E * 4)                          # live f32 temps

    return pl.pallas_call(
        partial(_qkv_proj_kernel, nhead=nhead, eps=1e-5),
        out_shape=(out_sds, out_sds, out_sds),
        grid_spec=pltpu.PrefetchScalarGridSpec(
            num_scalar_prefetch=0,
            grid=grid,
            in_specs=[seq_spec, seq_spec,
                      _const_spec((1, E)), _const_spec((1, E)),
                      _const_spec((E, E)), _const_spec((E, E)), _const_spec((E, E)),
                      _const_spec((1, E)), _const_spec((1, E)), _const_spec((1, E))],
            out_specs=(head_spec, head_spec, head_spec)),
        compiler_params=pltpu.CompilerParams(
            dimension_semantics=("parallel", "parallel"),
            vmem_limit_bytes=_vmem_limit(est)),
    )(src_b, pos_b, kp["ln1_g"], kp["ln1_b"],
      kp["wq"], kp["wk"], kp["wv"], kp["bq"], kp["bk"], kp["bv"])


# --------------------------------------------------------------------------
# pass 2: flash-style attention (online softmax) + out-proj + residual
# --------------------------------------------------------------------------
def _flash_attn_kernel(q_ref, k_ref, v_ref, src_ref, wo_ref, bo_ref,
                       x1_ref, m_sc, l_sc, acc_sc, *, nhead):
    # NOTE: relies on ki (axis 2) being the innermost, sequentially executed
    # ("arbitrary") grid axis -- do not reorder the grid.
    f32, bf16 = jnp.float32, jnp.bfloat16
    E = wo_ref.shape[0]
    ki = pl.program_id(2)
    nk = pl.num_programs(2)

    @pl.when(ki == 0)
    def _init():
        m_sc[...] = jnp.full(m_sc.shape, -jnp.inf, dtype=f32)
        l_sc[...] = jnp.zeros(l_sc.shape, dtype=f32)
        acc_sc[...] = jnp.zeros(acc_sc.shape, dtype=f32)

    qh = q_ref[0]                                   # (H, tq, Dh) bf16, pre-scaled
    kh = k_ref[0]                                   # (H, tk, Dh) bf16
    vh = v_ref[0]                                   # (H, tk, Dh) bf16

    s = jnp.einsum('hqd,hkd->hqk', qh, kh, preferred_element_type=f32)
    m_prev = m_sc[...]
    m_new = jnp.maximum(m_prev, jnp.max(s, axis=-1, keepdims=True))
    alpha = jnp.exp(m_prev - m_new)
    p = jnp.exp(s - m_new)
    l_sc[...] = alpha * l_sc[...] + jnp.sum(p, axis=-1, keepdims=True)
    acc_sc[...] = alpha * acc_sc[...] + jnp.einsum(
        'hqk,hkd->hqd', p.astype(bf16), vh, preferred_element_type=f32)
    m_sc[...] = m_new

    @pl.when(ki == nk - 1)
    def _finalize():
        # approx reciprocal runs on the EUP slot; ~1e-3 rel err (documented).
        oh = acc_sc[...] * pl.reciprocal(l_sc[...], approx=True)   # (H, tq, Dh)
        tq = oh.shape[1]
        attn = jnp.transpose(oh, (1, 0, 2)).reshape(tq, E)          # merge heads
        attn = jnp.dot(attn.astype(bf16), wo_ref[...],
                       preferred_element_type=f32) + bo_ref[0]
        x1_ref[0] = (src_ref[0].astype(f32) + attn).astype(x1_ref.dtype)


def _flash_attention(q_h, k_h, v_h, src_b, kp, *, nhead, block_q, block_k):
    N, H, L, Dh = q_h.shape
    E = H * Dh
    grid = (N, L // block_q, L // block_k)

    q_spec = pl.BlockSpec((1, H, block_q, Dh), lambda b, qi, ki: (b, 0, qi, 0))
    kv_spec = pl.BlockSpec((1, H, block_k, Dh), lambda b, qi, ki: (b, 0, ki, 0))
    row_spec = pl.BlockSpec((1, block_q, E), lambda b, qi, ki: (b, qi, 0))

    est = (2 * E * E + 4 * E                                  # Wo bf16 + bo
           + 2 * H * block_q * Dh * 2                         # Q (double-buffered)
           + 2 * 2 * H * block_k * Dh * 2                     # K, V
           + 2 * 2 * block_q * E * 4                          # src in + x1 out
           + H * block_q * Dh * 4 + 2 * H * block_q * 128 * 4 # scratch (lane-padded)
           + H * block_q * block_k * 6                        # s (f32) + p (bf16)
           + 3 * block_q * E * 4)                             # finalize temps

    return pl.pallas_call(
        partial(_flash_attn_kernel, nhead=nhead),
        out_shape=jax.ShapeDtypeStruct((N, L, E), jnp.float32),
        grid_spec=pltpu.PrefetchScalarGridSpec(
            num_scalar_prefetch=0,
            grid=grid,
            in_specs=[q_spec, kv_spec, kv_spec, row_spec,
                      _const_spec((E, E)), _const_spec((1, E))],
            out_specs=row_spec,
            scratch_shapes=[
                pltpu.VMEM((H, block_q, 1), jnp.float32),     # running max
                pltpu.VMEM((H, block_q, 1), jnp.float32),     # running sum
                pltpu.VMEM((H, block_q, Dh), jnp.float32),    # output accumulator
            ]),
        compiler_params=pltpu.CompilerParams(
            dimension_semantics=("parallel", "parallel", "arbitrary"),
            vmem_limit_bytes=_vmem_limit(est)),
    )(q_h, k_h, v_h, src_b, kp["wo"], kp["bo"])


# --------------------------------------------------------------------------
# pass 3: LN2 + FFN + residual
# --------------------------------------------------------------------------
def _ffn_kernel(x1_ref, ln2_g_ref, ln2_b_ref, w1_ref, b1_ref, w2_ref, b2_ref,
                o_ref, *, eps):
    f32, bf16 = jnp.float32, jnp.bfloat16
    x1 = x1_ref[0].astype(f32)
    x2 = _layer_norm(x1, ln2_g_ref[0], ln2_b_ref[0], eps)
    h = jnp.dot(x2.astype(bf16), w1_ref[...], preferred_element_type=f32) + b1_ref[0]
    h = jnp.maximum(h, 0.0)                                   # ReLU
    ffn = jnp.dot(h.astype(bf16), w2_ref[...], preferred_element_type=f32) + b2_ref[0]
    o_ref[0] = (x1 + ffn).astype(o_ref.dtype)                 # src + dropout2(ffn)


def _ffn(x1, kp, *, block):
    N, L, E = x1.shape
    F = kp["w1"].shape[1]
    grid = (N, L // block)
    seq_spec = pl.BlockSpec((1, block, E), lambda b, s: (b, s, 0))

    est = (2 * 2 * E * F + 4 * (3 * E + F)
           + 2 * 2 * block * E * 4
           + 2 * block * F * 4 + 4 * block * E * 4)

    return pl.pallas_call(
        partial(_ffn_kernel, eps=1e-5),
        out_shape=jax.ShapeDtypeStruct((N, L, E), jnp.float32),
        grid_spec=pltpu.PrefetchScalarGridSpec(
            num_scalar_prefetch=0,
            grid=grid,
            in_specs=[seq_spec,
                      _const_spec((1, E)), _const_spec((1, E)),
                      _const_spec((E, F)), _const_spec((1, F)),
                      _const_spec((F, E)), _const_spec((1, E))],
            out_specs=seq_spec),
        compiler_params=pltpu.CompilerParams(
            dimension_semantics=("parallel", "parallel"),
            vmem_limit_bytes=_vmem_limit(est)),
    )(x1, kp["ln2_g"], kp["ln2_b"], kp["w1"], kp["b1"], kp["w2"], kp["b2"])


# --------------------------------------------------------------------------
# wrapper
# --------------------------------------------------------------------------
def prepare_encoder_params(params, *, nhead):
    """One-time weight prep: transpose, fold 1/sqrt(Dh) into Wq/bq, cast matmul
    operands to bf16 (MXU native).  Cache the result per layer in real use."""
    E = params["out_w"].shape[0]
    F = params["lin1_w"].shape[0]
    Dh = E // nhead
    scale = 1.0 / math.sqrt(Dh)
    f32, wdt = jnp.float32, jnp.bfloat16
    in_w, in_b = params["in_w"], params["in_b"]
    return dict(
        ln1_g=params["ln1_g"].reshape(1, E).astype(f32),
        ln1_b=params["ln1_b"].reshape(1, E).astype(f32),
        wq=(in_w[:E].T * scale).astype(wdt),
        wk=in_w[E:2 * E].T.astype(wdt),
        wv=in_w[2 * E:].T.astype(wdt),
        bq=(in_b[:E] * scale).reshape(1, E).astype(f32),
        bk=in_b[E:2 * E].reshape(1, E).astype(f32),
        bv=in_b[2 * E:].reshape(1, E).astype(f32),
        wo=params["out_w"].T.astype(wdt),
        bo=params["out_b"].reshape(1, E).astype(f32),
        ln2_g=params["ln2_g"].reshape(1, E).astype(f32),
        ln2_b=params["ln2_b"].reshape(1, E).astype(f32),
        w1=params["lin1_w"].T.astype(wdt),                    # (E, F)
        b1=params["lin1_b"].reshape(1, F).astype(f32),
        w2=params["lin2_w"].T.astype(wdt),                    # (F, E)
        b2=params["lin2_b"].reshape(1, E).astype(f32),
    )


def transformer_encoder_layer(src, pos, params, *, nhead,
                              block_q=None, block_k=None):
    """src, pos: (L, N, E) float32 (PyTorch MHA layout). Returns (L, N, E)."""
    L, N, E = src.shape
    assert E % nhead == 0, "d_model must be divisible by nhead"
    if block_q is None:
        block_q = _pick_block(L, 512)
    if block_k is None:
        block_k = _pick_block(L, 512)
    assert L % block_q == 0 and L % block_k == 0, "seq len must divide tiles"

    kp = prepare_encoder_params(params, nhead=nhead)

    # (L, N, E) -> (N, L, E); one cheap pass vs. the streaming traffic.
    src_b = jnp.transpose(src, (1, 0, 2))
    pos_b = jnp.transpose(pos, (1, 0, 2))

    # pass 1: LN1 + pos + Q/K/V projection, head-split bf16 (N, H, L, Dh)
    q_h, k_h, v_h = _qkv_projection(src_b, pos_b, kp, nhead=nhead, block=block_q)
    # pass 2: flash attention + out-proj + residual -> x1 (N, L, E) f32
    x1 = _flash_attention(q_h, k_h, v_h, src_b, kp, nhead=nhead,
                          block_q=block_q, block_k=block_k)
    # pass 3: LN2 + FFN + residual
    out = _ffn(x1, kp, block=block_q)
    return jnp.transpose(out, (1, 0, 2))


# --------------------------------------------------------------------------
# plain-JAX reference (eval mode), mirroring the kernel's bf16 matmuls
# --------------------------------------------------------------------------
def _reference(src, pos, params, *, nhead):
    L, N, E = src.shape
    Dh = E // nhead
    eps = 1e-5
    scale = 1.0 / math.sqrt(Dh)
    f32, bf16 = jnp.float32, jnp.bfloat16

    def ln(x, g, b):
        mu = jnp.mean(x, -1, keepdims=True)
        var = jnp.mean(jnp.square(x - mu), -1, keepdims=True)
        return (x - mu) * jax.lax.rsqrt(var + eps) * g + b

    def mm(x, w_t, b):
        return jnp.dot(x.astype(bf16), w_t.astype(bf16),
                       preferred_element_type=f32) + b

    Wq, Wk, Wv = params["in_w"][:E], params["in_w"][E:2 * E], params["in_w"][2 * E:]
    bq, bk, bv = params["in_b"][:E], params["in_b"][E:2 * E], params["in_b"][2 * E:]

    xn = ln(src, params["ln1_g"], params["ln1_b"])
    qk = xn + pos
    Q = mm(qk, Wq.T * scale, bq * scale)     # scale folded, same as the kernel
    K = mm(qk, Wk.T, bk)
    V = mm(xn, Wv.T, bv)

    def heads(t):   # (L, N, E) -> (N*H, L, Dh)
        return jnp.transpose(t.reshape(L, N * nhead, Dh), (1, 0, 2))

    s = jnp.einsum('bqd,bkd->bqk', heads(Q).astype(bf16), heads(K).astype(bf16),
                   preferred_element_type=f32)
    p = jax.nn.softmax(s, axis=-1)
    o = jnp.einsum('bqk,bkd->bqd', p.astype(bf16), heads(V).astype(bf16),
                   preferred_element_type=f32)
    o = jnp.transpose(o, (1, 0, 2)).reshape(L, N, E)
    attn = mm(o, params["out_w"].T, params["out_b"])

    x1 = src + attn
    x2 = ln(x1, params["ln2_g"], params["ln2_b"])
    hidden = jnp.maximum(mm(x2, params["lin1_w"].T, params["lin1_b"]), 0.0)
    ffn = mm(hidden, params["lin2_w"].T, params["lin2_b"])
    return x1 + ffn


if __name__ == "__main__":
    # small but lane-dense shapes: d_model=128, nhead=4, ffn=256, seq=32, batch=2
    L, N, E, H, F = 32, 2, 128, 4, 256

    key = jax.random.PRNGKey(0)
    ks = jax.random.split(key, 14)

    params = {
        "ln1_g": 1.0 + 0.1 * jax.random.normal(ks[0], (E,), jnp.float32),
        "ln1_b": 0.1 * jax.random.normal(ks[1], (E,), jnp.float32),
        "in_w":  0.1 * jax.random.normal(ks[2], (3 * E, E), jnp.float32),
        "in_b":  0.1 * jax.random.normal(ks[3], (3 * E,), jnp.float32),
        "out_w": 0.1 * jax.random.normal(ks[4], (E, E), jnp.float32),
        "out_b": 0.1 * jax.random.normal(ks[5], (E,), jnp.float32),
        "ln2_g": 1.0 + 0.1 * jax.random.normal(ks[6], (E,), jnp.float32),
        "ln2_b": 0.1 * jax.random.normal(ks[7], (E,), jnp.float32),
        "lin1_w": 0.1 * jax.random.normal(ks[8], (F, E), jnp.float32),
        "lin1_b": 0.1 * jax.random.normal(ks[9], (F,), jnp.float32),
        "lin2_w": 0.1 * jax.random.normal(ks[10], (E, F), jnp.float32),
        "lin2_b": 0.1 * jax.random.normal(ks[11], (E,), jnp.float32),
    }
    src = jax.random.normal(ks[12], (L, N, E), jnp.float32)
    pos = jax.random.normal(ks[13], (L, N, E), jnp.float32)

    # small q/k tiles so the online-softmax accumulation over ki is exercised
    out = transformer_encoder_layer(src, pos, params, nhead=H,
                                    block_q=16, block_k=16)
    out = jax.block_until_ready(out)

    ref = _reference(src, pos, params, nhead=H)
    assert out.shape == (L, N, E)
    max_err = float(jnp.max(jnp.abs(out - ref)))
    assert jnp.allclose(out, ref, atol=2e-2, rtol=2e-2), (
        f"mismatch vs JAX reference (max abs err {max_err})")
    print("KERNEL_OK")
</pallas_src>

<mosaic_0001>
module attributes {stable_mosaic.version = 11 : i64} {
  func.func @_qkv_proj_kernel(%arg0: i32, %arg1: i32, %arg2: memref<1x16x128xf32, #tpu.memory_space<vmem>>, %arg3: memref<1x16x128xf32, #tpu.memory_space<vmem>>, %arg4: memref<1x128xf32, #tpu.memory_space<vmem>>, %arg5: memref<1x128xf32, #tpu.memory_space<vmem>>, %arg6: memref<128x128xbf16, #tpu.memory_space<vmem>>, %arg7: memref<128x128xbf16, #tpu.memory_space<vmem>>, %arg8: memref<128x128xbf16, #tpu.memory_space<vmem>>, %arg9: memref<1x128xf32, #tpu.memory_space<vmem>>, %arg10: memref<1x128xf32, #tpu.memory_space<vmem>>, %arg11: memref<1x128xf32, #tpu.memory_space<vmem>>, %arg12: memref<1x4x16x32xbf16, #tpu.memory_space<vmem>>, %arg13: memref<1x4x16x32xbf16, #tpu.memory_space<vmem>>, %arg14: memref<1x4x16x32xbf16, #tpu.memory_space<vmem>>) attributes {dimension_semantics = [#tpu.dimension_semantics<parallel>, #tpu.dimension_semantics<parallel>], iteration_bounds = array<i64: 2, 2>, scalar_prefetch = 0 : i64, scratch_operands = 0 : i64, tpu.core_type = #tpu.core_type<tc>, window_params = [{transform_indices = @transform_0, window_bounds = array<i64: 1, 16, 128>}, {transform_indices = @transform_1, window_bounds = array<i64: 1, 16, 128>}, {pipeline_mode = #tpu.pipeline_mode<synchronous>, transform_indices = @transform_2, window_bounds = array<i64: 1, 128>}, {pipeline_mode = #tpu.pipeline_mode<synchronous>, transform_indices = @transform_3, window_bounds = array<i64: 1, 128>}, {pipeline_mode = #tpu.pipeline_mode<synchronous>, transform_indices = @transform_4, window_bounds = array<i64: 128, 128>}, {pipeline_mode = #tpu.pipeline_mode<synchronous>, transform_indices = @transform_5, window_bounds = array<i64: 128, 128>}, {pipeline_mode = #tpu.pipeline_mode<synchronous>, transform_indices = @transform_6, window_bounds = array<i64: 128, 128>}, {pipeline_mode = #tpu.pipeline_mode<synchronous>, transform_indices = @transform_7, window_bounds = array<i64: 1, 128>}, {pipeline_mode = #tpu.pipeline_mode<synchronous>, transform_indices = @transform_8, window_bounds = array<i64: 1, 128>}, {pipeline_mode = #tpu.pipeline_mode<synchronous>, transform_indices = @transform_9, window_bounds = array<i64: 1, 128>}, {transform_indices = @transform_10, window_bounds = array<i64: 1, 4, 16, 32>}, {transform_indices = @transform_11, window_bounds = array<i64: 1, 4, 16, 32>}, {transform_indices = @transform_12, window_bounds = array<i64: 1, 4, 16, 32>}]} {
    %c0 = arith.constant 0 : index
    %c0_0 = arith.constant 0 : index
    %c0_1 = arith.constant 0 : index
    %0 = vector.load %arg2[%c0, %c0_0, %c0_1] : memref<1x16x128xf32, #tpu.memory_space<vmem>>, vector<1x16x128xf32>
    %1 = vector.shape_cast %0 : vector<1x16x128xf32> to vector<16x128xf32>
    %c0_2 = arith.constant 0 : index
    %c0_3 = arith.constant 0 : index
    %2 = vector.load %arg4[%c0_2, %c0_3] : memref<1x128xf32, #tpu.memory_space<vmem>>, vector<1x128xf32>
    %3 = vector.shape_cast %2 : vector<1x128xf32> to vector<128xf32>
    %c0_4 = arith.constant 0 : index
    %c0_5 = arith.constant 0 : index
    %4 = vector.load %arg5[%c0_4, %c0_5] : memref<1x128xf32, #tpu.memory_space<vmem>>, vector<1x128xf32>
    %5 = vector.shape_cast %4 : vector<1x128xf32> to vector<128xf32>
    %cst = arith.constant dense<0.000000e+00> : vector<16xf32>
    %6 = vector.multi_reduction <add>, %1, %cst [1] : vector<16x128xf32> to vector<16xf32>
    %7 = vector.shape_cast %6 : vector<16xf32> to vector<16x1xf32>
    %cst_6 = arith.constant 1.280000e+02 : f32
    %8 = vector.broadcast %cst_6 : f32 to vector<16x1xf32>
    %9 = arith.divf %7, %8 : vector<16x1xf32>
    %10 = vector.broadcast %9 : vector<16x1xf32> to vector<16x128xf32>
    %11 = arith.subf %1, %10 : vector<16x128xf32>
    %12 = arith.mulf %11, %11 : vector<16x128xf32>
    %cst_7 = arith.constant dense<0.000000e+00> : vector<16xf32>
    %13 = vector.multi_reduction <add>, %12, %cst_7 [1] : vector<16x128xf32> to vector<16xf32>
    %14 = vector.shape_cast %13 : vector<16xf32> to vector<16x1xf32>
    %cst_8 = arith.constant 1.280000e+02 : f32
    %15 = vector.broadcast %cst_8 : f32 to vector<16x1xf32>
    %16 = arith.divf %14, %15 : vector<16x1xf32>
    %17 = vector.broadcast %9 : vector<16x1xf32> to vector<16x128xf32>
    %18 = arith.subf %1, %17 : vector<16x128xf32>
    %cst_9 = arith.constant 9.99999974E-6 : f32
    %19 = vector.broadcast %cst_9 : f32 to vector<16x1xf32>
    %20 = arith.addf %16, %19 : vector<16x1xf32>
    %21 = math.rsqrt %20 : vector<16x1xf32>
    %22 = vector.broadcast %21 : vector<16x1xf32> to vector<16x128xf32>
    %23 = arith.mulf %18, %22 : vector<16x128xf32>
    %24 = vector.shape_cast %3 : vector<128xf32> to vector<1x128xf32>
    %25 = vector.broadcast %24 : vector<1x128xf32> to vector<16x128xf32>
    %26 = arith.mulf %23, %25 : vector<16x128xf32>
    %27 = vector.shape_cast %5 : vector<128xf32> to vector<1x128xf32>
    %28 = vector.broadcast %27 : vector<1x128xf32> to vector<16x128xf32>
    %29 = arith.addf %26, %28 : vector<16x128xf32>
    %c0_10 = arith.constant 0 : index
    %c0_11 = arith.constant 0 : index
    %c0_12 = arith.constant 0 : index
    %30 = vector.load %arg3[%c0_10, %c0_11, %c0_12] : memref<1x16x128xf32, #tpu.memory_space<vmem>>, vector<1x16x128xf32>
    %31 = vector.shape_cast %30 : vector<1x16x128xf32> to vector<16x128xf32>
    %32 = arith.addf %29, %31 : vector<16x128xf32>
    %33 = arith.truncf %32 : vector<16x128xf32> to vector<16x128xbf16>
    %34 = arith.truncf %29 : vector<16x128xf32> to vector<16x128xbf16>
    %c0_13 = arith.constant 0 : index
    %c0_14 = arith.constant 0 : index
    %35 = vector.load %arg6[%c0_13, %c0_14] : memref<128x128xbf16, #tpu.memory_space<vmem>>, vector<128x128xbf16>
    %cst_15 = arith.constant dense<0.000000e+00> : vector<16x128xf32>
    %36 = tpu.matmul %33, %35, %cst_15 {dimension_numbers = #tpu.dot_dimension_numbers<[1], [0], [0], [1], [0, 0, 1, 1], [], []>} : vector<16x128xbf16>, vector<128x128xbf16>, vector<16x128xf32> -> vector<16x128xf32>
    %c0_16 = arith.constant 0 : index
    %c0_17 = arith.constant 0 : index
    %37 = vector.load %arg9[%c0_16, %c0_17] : memref<1x128xf32, #tpu.memory_space<vmem>>, vector<1x128xf32>
    %38 = vector.shape_cast %37 : vector<1x128xf32> to vector<128xf32>
    %39 = vector.shape_cast %38 : vector<128xf32> to vector<1x128xf32>
    %40 = vector.broadcast %39 : vector<1x128xf32> to vector<16x128xf32>
    %41 = arith.addf %36, %40 : vector<16x128xf32>
    %42 = vector.shape_cast %41 : vector<16x128xf32> to vector<16x4x32xf32>
    %43 = tpu.transpose %42, [1, 0, 2] : vector<16x4x32xf32> -> vector<4x16x32xf32>
    %44 = arith.truncf %43 : vector<4x16x32xf32> to vector<4x16x32xbf16>
    %c0_18 = arith.constant 0 : index
    %c0_19 = arith.constant 0 : index
    %c0_20 = arith.constant 0 : index
    %c0_21 = arith.constant 0 : index
    %45 = vector.load %arg12[%c0_18, %c0_19, %c0_20, %c0_21] : memref<1x4x16x32xbf16, #tpu.memory_space<vmem>>, vector<1x4x16x32xbf16>
    %46 = vector.shape_cast %45 : vector<1x4x16x32xbf16> to vector<4x16x32xbf16>
    %47 = vector.shape_cast %44 : vector<4x16x32xbf16> to vector<1x4x16x32xbf16>
    tpu.vector_store %arg12[%c0_18, %c0_19, %c0_20, %c0_21], %47 {strides = array<i32>} : memref<1x4x16x32xbf16, #tpu.memory_space<vmem>>, vector<1x4x16x32xbf16>,
    %c0_22 = arith.constant 0 : index
    %c0_23 = arith.constant 0 : index
    %48 = vector.load %arg7[%c0_22, %c0_23] : memref<128x128xbf16, #tpu.memory_space<vmem>>, vector<128x128xbf16>
    %cst_24 = arith.constant dense<0.000000e+00> : vector<16x128xf32>
    %49 = tpu.matmul %33, %48, %cst_24 {dimension_numbers = #tpu.dot_dimension_numbers<[1], [0], [0], [1], [0, 0, 1, 1], [], []>} : vector<16x128xbf16>, vector<128x128xbf16>, vector<16x128xf32> -> vector<16x128xf32>
    %c0_25 = arith.constant 0 : index
    %c0_26 = arith.constant 0 : index
    %50 = vector.load %arg10[%c0_25, %c0_26] : memref<1x128xf32, #tpu.memory_space<vmem>>, vector<1x128xf32>
    %51 = vector.shape_cast %50 : vector<1x128xf32> to vector<128xf32>
    %52 = vector.shape_cast %51 : vector<128xf32> to vector<1x128xf32>
    %53 = vector.broadcast %52 : vector<1x128xf32> to vector<16x128xf32>
    %54 = arith.addf %49, %53 : vector<16x128xf32>
    %55 = vector.shape_cast %54 : vector<16x128xf32> to vector<16x4x32xf32>
    %56 = tpu.transpose %55, [1, 0, 2] : vector<16x4x32xf32> -> vector<4x16x32xf32>
    %57 = arith.truncf %56 : vector<4x16x32xf32> to vector<4x16x32xbf16>
    %c0_27 = arith.constant 0 : index
    %c0_28 = arith.constant 0 : index
    %c0_29 = arith.constant 0 : index
    %c0_30 = arith.constant 0 : index
    %58 = vector.load %arg13[%c0_27, %c0_28, %c0_29, %c0_30] : memref<1x4x16x32xbf16, #tpu.memory_space<vmem>>, vector<1x4x16x32xbf16>
    %59 = vector.shape_cast %58 : vector<1x4x16x32xbf16> to vector<4x16x32xbf16>
    %60 = vector.shape_cast %57 : vector<4x16x32xbf16> to vector<1x4x16x32xbf16>
    tpu.vector_store %arg13[%c0_27, %c0_28, %c0_29, %c0_30], %60 {strides = array<i32>} : memref<1x4x16x32xbf16, #tpu.memory_space<vmem>>, vector<1x4x16x32xbf16>,
    %c0_31 = arith.constant 0 : index
    %c0_32 = arith.constant 0 : index
    %61 = vector.load %arg8[%c0_31, %c0_32] : memref<128x128xbf16, #tpu.memory_space<vmem>>, vector<128x128xbf16>
    %cst_33 = arith.constant dense<0.000000e+00> : vector<16x128xf32>
    %62 = tpu.matmul %34, %61, %cst_33 {dimension_numbers = #tpu.dot_dimension_numbers<[1], [0], [0], [1], [0, 0, 1, 1], [], []>} : vector<16x128xbf16>, vector<128x128xbf16>, vector<16x128xf32> -> vector<16x128xf32>
    %c0_34 = arith.constant 0 : index
    %c0_35 = arith.constant 0 : index
    %63 = vector.load %arg11[%c0_34, %c0_35] : memref<1x128xf32, #tpu.memory_space<vmem>>, vector<1x128xf32>
    %64 = vector.shape_cast %63 : vector<1x128xf32> to vector<128xf32>
    %65 = vector.shape_cast %64 : vector<128xf32> to vector<1x128xf32>
    %66 = vector.broadcast %65 : vector<1x128xf32> to vector<16x128xf32>
    %67 = arith.addf %62, %66 : vector<16x128xf32>
    %68 = vector.shape_cast %67 : vector<16x128xf32> to vector<16x4x32xf32>
    %69 = tpu.transpose %68, [1, 0, 2] : vector<16x4x32xf32> -> vector<4x16x32xf32>
    %70 = arith.truncf %69 : vector<4x16x32xf32> to vector<4x16x32xbf16>
    %c0_36 = arith.constant 0 : index
    %c0_37 = arith.constant 0 : index
    %c0_38 = arith.constant 0 : index
    %c0_39 = arith.constant 0 : index
    %71 = vector.load %arg14[%c0_36, %c0_37, %c0_38, %c0_39] : memref<1x4x16x32xbf16, #tpu.memory_space<vmem>>, vector<1x4x16x32xbf16>
    %72 = vector.shape_cast %71 : vector<1x4x16x32xbf16> to vector<4x16x32xbf16>
    %73 = vector.shape_cast %70 : vector<4x16x32xbf16> to vector<1x4x16x32xbf16>
    tpu.vector_store %arg14[%c0_36, %c0_37, %c0_38, %c0_39], %73 {strides = array<i32>} : memref<1x4x16x32xbf16, #tpu.memory_space<vmem>>, vector<1x4x16x32xbf16>,
    return
  }
  func.func @transform_0(%arg0: i32, %arg1: i32) -> (i32, i32, i32) {
    %c0_i32 = arith.constant 0 : i32
    %c0_i32_0 = arith.constant 0 : i32
    return %arg0, %arg1, %c0_i32 : i32, i32, i32
  }
  func.func @transform_1(%arg0: i32, %arg1: i32) -> (i32, i32, i32) {
    %c0_i32 = arith.constant 0 : i32
    %c0_i32_0 = arith.constant 0 : i32
    return %arg0, %arg1, %c0_i32 : i32, i32, i32
  }
  func.func @transform_2(%arg0: i32, %arg1: i32) -> (i32, i32) {
    %c0_i32 = arith.constant 0 : i32
    %c0_i32_0 = arith.constant 0 : i32
    %c0_i32_1 = arith.constant 0 : i32
    return %c0_i32, %c0_i32_0 : i32, i32
  }
  func.func @transform_3(%arg0: i32, %arg1: i32) -> (i32, i32) {
    %c0_i32 = arith.constant 0 : i32
    %c0_i32_0 = arith.constant 0 : i32
    %c0_i32_1 = arith.constant 0 : i32
    return %c0_i32, %c0_i32_0 : i32, i32
  }
  func.func @transform_4(%arg0: i32, %arg1: i32) -> (i32, i32) {
    %c0_i32 = arith.constant 0 : i32
    %c0_i32_0 = arith.constant 0 : i32
    %c0_i32_1 = arith.constant 0 : i32
    return %c0_i32, %c0_i32_0 : i32, i32
  }
  func.func @transform_5(%arg0: i32, %arg1: i32) -> (i32, i32) {
    %c0_i32 = arith.constant 0 : i32
    %c0_i32_0 = arith.constant 0 : i32
    %c0_i32_1 = arith.constant 0 : i32
    return %c0_i32, %c0_i32_0 : i32, i32
  }
  func.func @transform_6(%arg0: i32, %arg1: i32) -> (i32, i32) {
    %c0_i32 = arith.constant 0 : i32
    %c0_i32_0 = arith.constant 0 : i32
    %c0_i32_1 = arith.constant 0 : i32
    return %c0_i32, %c0_i32_0 : i32, i32
  }
  func.func @transform_7(%arg0: i32, %arg1: i32) -> (i32, i32) {
    %c0_i32 = arith.constant 0 : i32
    %c0_i32_0 = arith.constant 0 : i32
    %c0_i32_1 = arith.constant 0 : i32
    return %c0_i32, %c0_i32_0 : i32, i32
  }
  func.func @transform_8(%arg0: i32, %arg1: i32) -> (i32, i32) {
    %c0_i32 = arith.constant 0 : i32
    %c0_i32_0 = arith.constant 0 : i32
    %c0_i32_1 = arith.constant 0 : i32
    return %c0_i32, %c0_i32_0 : i32, i32
  }
  func.func @transform_9(%arg0: i32, %arg1: i32) -> (i32, i32) {
    %c0_i32 = arith.constant 0 : i32
    %c0_i32_0 = arith.constant 0 : i32
    %c0_i32_1 = arith.constant 0 : i32
    return %c0_i32, %c0_i32_0 : i32, i32
  }
  func.func @transform_10(%arg0: i32, %arg1: i32) -> (i32, i32, i32, i32) {
    %c0_i32 = arith.constant 0 : i32
    %c0_i32_0 = arith.constant 0 : i32
    %c0_i32_1 = arith.constant 0 : i32
    return %arg0, %c0_i32, %arg1, %c0_i32_0 : i32, i32, i32, i32
  }
  func.func @transform_11(%arg0: i32, %arg1: i32) -> (i32, i32, i32, i32) {
    %c0_i32 = arith.constant 0 : i32
    %c0_i32_0 = arith.constant 0 : i32
    %c0_i32_1 = arith.constant 0 : i32
    return %arg0, %c0_i32, %arg1, %c0_i32_0 : i32, i32, i32, i32
  }
  func.func @transform_12(%arg0: i32, %arg1: i32) -> (i32, i32, i32, i32) {
    %c0_i32 = arith.constant 0 : i32
    %c0_i32_0 = arith.constant 0 : i32
    %c0_i32_1 = arith.constant 0 : i32
    return %arg0, %c0_i32, %arg1, %c0_i32_0 : i32, i32, i32, i32
  }
}

</mosaic_0001>

<llo_original>
// kernel: tpu_custom_call.1
$region0: #{tpu_custom_call.1}
  #allocation0 [shape = 'u32[]', space=smem, size = 0x4, offset = 0x4, fixed_abs, tag = 'smem constant byte address 0x4 - core index']
  #allocation1 [shape = 'u32[144,128]{1,0:T(1,128)}', space=vmem, size = 0x12000, scoped, tag = 'internal scratch']
  #allocation15 [shape = 's32[]', space=sflag, size = 0x4, offset = 0, fixed_abs, tag = 'sflag constant byte address 0x0 - dummy sync flag']
  #allocation17 [shape = 's32[]', space=sflag, size = 0x4, offset = 0, fixed_abs, tag = 'sflag constant byte address 0x0 - dummy sync flag']
  #allocation19 [shape = 's32[]', space=sflag, size = 0x4, offset = 0, fixed_abs, tag = 'sflag constant byte address 0x0 - dummy sync flag']
  %s0 = inlined_call_operand.hbm [shape: f32[2,32,128], index: 0, kind: input, shape index: {}]
  %s1 = inlined_call_operand.hbm [shape: f32[2,32,128], index: 1, kind: input, shape index: {}]
  %s2 = inlined_call_operand.vmem [shape: f32[1,128], index: 2, kind: input, shape index: {}]
  %s3 = inlined_call_operand.vmem [shape: f32[1,128], index: 3, kind: input, shape index: {}]
  %s4 = inlined_call_operand.hbm [shape: bf16[128,128], index: 4, kind: input, shape index: {}]
  %s5 = inlined_call_operand.hbm [shape: bf16[128,128], index: 5, kind: input, shape index: {}]
  %s6 = inlined_call_operand.hbm [shape: bf16[128,128], index: 6, kind: input, shape index: {}]
  %s7 = inlined_call_operand.vmem [shape: f32[1,128], index: 7, kind: input, shape index: {}]
  %s8 = inlined_call_operand.vmem [shape: f32[1,128], index: 8, kind: input, shape index: {}]
  %s9 = inlined_call_operand.vmem [shape: f32[1,128], index: 9, kind: input, shape index: {}]
  %s10 = inlined_call_operand.hbm [shape: bf16[2,4,32,32], index: 10, kind: output, shape index: {0}]
  %s11 = inlined_call_operand.hbm [shape: bf16[2,4,32,32], index: 11, kind: output, shape index: {1}]
  %s12 = inlined_call_operand.hbm [shape: bf16[2,4,32,32], index: 12, kind: output, shape index: {2}]
  %13 = xla_tuple %s10, %s11, %s12
  %s14 = sld [smem:[#allocation0]]
  $region109: #{tpu_custom_call.1} parent=0
    _
  %s16 = ssub.s32 1, %s14
  %s17 = scalar_select 0, %s16, %s14
  $region1: #{tpu_custom_call.1} parent=0
    #allocation2 [shape = 'u8[16384]{0}', space=vmem, size = 0x4000, scoped, tag = 'input window, operand 0']
    #allocation3 [shape = 's32[2]{0}', space=sflag, size = 0x8, scoped, tag = 'scoped memory for tpu_custom_call.1']
    #allocation4 [shape = 's32[2]{0}', space=sflag, size = 0x8, scoped, tag = 'scoped memory for tpu_custom_call.1']
    #allocation5 [shape = 'u8[16384]{0}', space=vmem, size = 0x4000, scoped, tag = 'input window, operand 1']
    #allocation6 [shape = 's32[2]{0}', space=sflag, size = 0x8, scoped, tag = 'scoped memory for tpu_custom_call.1']
    #allocation7 [shape = 'u8[32768]{0}', space=vmem, size = 0x8000, scoped, tag = 'input window, operand 4, single buffered']
    #allocation8 [shape = 'u8[32768]{0}', space=vmem, size = 0x8000, scoped, tag = 'input window, operand 5, single buffered']
    #allocation9 [shape = 's32[1]{0}', space=sflag, size = 0x4, scoped, tag = 'scoped memory for tpu_custom_call.1']
    #allocation10 [shape = 'u8[32768]{0}', space=vmem, size = 0x8000, scoped, tag = 'input window, operand 6, single buffered']
    #allocation11 [shape = 'u8[32768]{0}', space=vmem, size = 0x8000, scoped, tag = 'output window, operand 0']
    #allocation12 [shape = 'u8[32768]{0}', space=vmem, size = 0x8000, scoped, tag = 'output window, operand 1']
    #allocation13 [shape = 's32[2]{0}', space=sflag, size = 0x8, scoped, tag = 'scoped memory for tpu_custom_call.1']
    #allocation14 [shape = 'u8[32768]{0}', space=vmem, size = 0x8000, scoped, tag = 'output window, operand 2']
    %18 = vsyncpa [#allocation3], 0
    %s19 = scalar_lea.sflag [#allocation3], 1
    %20 = vsyncpa %s19, 0
    %21 = vsyncpa [#allocation6], 0
    %s22 = scalar_lea.sflag [#allocation6], 1
    %23 = vsyncpa %s22, 0
    %24 = vsyncpa [#allocation9], 0
    %25 = vsyncpa [#allocation4], 0
    %s26 = scalar_lea.sflag [#allocation4], 1
    %27 = vsyncpa %s26, 0
    %28 = vsyncpa [#allocation13], 0
    %s29 = scalar_lea.sflag [#allocation13], 1
    %30 = vsyncpa %s29, 0
    loop: start=0, step=1, limit=6
    $region2: #{tpu_custom_call.1} parent=1 // loop_pre_header
      _
    $region3: #{tpu_custom_call.1} parent=1 // loop_header
      %s32 = sphi 0, %s36
      %p33 = scmp.ge.s32.totalorder %s32, 6
      %s39 = sphi 0, %s51
      %s40 = sphi 0, %s47
      %s41 = sphi 0, %s39
      %s42 = sphi 0, %s40
      %s43 = sphi 0, %s41
      %s44 = sphi 0, %s42
      %s56 = sphi 0, %s58
      %s59 = sphi 0, %s56
      %s60 = sphi 0, %s59
      %s76 = sphi 0, %s60
      %s84 = sphi 0, %s86
      %s87 = sphi 0, %s84
      %s88 = sphi 0, %s87
      %s104 = sphi 0, %s88
      %s108 = sphi 0, %s108
      %s110 = sphi 0, %s108
      %s111 = sphi 0, %s110
      %s125 = sphi 0, %s111
      %s129 = sphi 0, %s129
      %s131 = sphi 0, %s129
      %s132 = sphi 0, %s131
      %s146 = sphi 0, %s132
      %s150 = sphi 0, %s150
      %s152 = sphi 0, %s150
      %s153 = sphi 0, %s152
      %s167 = sphi 0, %s153
      %s171 = sphi 0, %s171
      %s173 = sphi 0, %s171
      %s174 = sphi 0, %s173
      %s188 = sphi 0, %s174
      %s192 = sphi 0, %s192
      %s194 = sphi 0, %s192
      %s195 = sphi 0, %s194
      %s209 = sphi 0, %s195
      %s213 = sphi 0, %s213
      %s215 = sphi 0, %s213
      %s216 = sphi 0, %s215
      %s230 = sphi 0, %s216
      %s234 = sphi 0, %s234
      %s236 = sphi 0, %s234
      %s237 = sphi 0, %s236
      %s251 = sphi 0, %s237
      %s255 = sphi 0, %s255
      %s257 = sphi 0, %s255
      %s258 = sphi 0, %s257
      %s272 = sphi 0, %s258
      %s280 = sphi 0, %s282
      %s283 = sphi 0, %s280
      %s284 = sphi 0, %s283
      %s300 = sphi 0, %s284
      %s308 = sphi 0, %s310
      %s311 = sphi 0, %s308
      %s312 = sphi 0, %s311
      %s328 = sphi 0, %s312
      %s336 = sphi 0, %s338
      %s339 = sphi 0, %s336
      %s340 = sphi 0, %s339
      %s356 = sphi 0, %s340
    $region4: #{tpu_custom_call.1} parent=1 // loop_header_branch
      %35 = sbr.rel (%p33) target = $region8
    $region5: #{tpu_custom_call.1} parent=1 // loop_body
      %s37 = ssub.s32 %s32, 1
      %s38 = ssub.s32 %s32, 2
      %s45 = sadd.s32 1, %s40
      %p46 = scmp.ge.s32.totalorder %s45, 2
      %s47 = scalar_select %p46, 0, %s45
      %s48 = sadd.s32 1, %s39
      %s49 = scalar_select %p46, %s48, %s39
      %p50 = scmp.ge.s32.totalorder %s49, 2
      %s51 = scalar_select %p50, 0, %s49
      %s52 = ssub.s32 %s39, %s51
      %s53 = ssub.s32 %s40, %s47
      %s54 = sor.u32 %s52, %s53
      %p55 = scmp.eq.s32.totalorder %s54, 0
      %s57 = sadd.s32 %s56, 1
      %s58 = scalar_select %p55, %s56, %s57
      %p61 = pneg %p55
      %p62 = scmp.eq.s32.totalorder %s32, 3
      %p63 = por %p61, %p62
      %p64 = scmp.ne.s32.totalorder %s56, %s59
      %p65 = scmp.eq.s32.totalorder %s32, 0
      %p66 = por %p64, %p65
      %p67 = scmp.ne.s32.totalorder %s56, %s59
      %p68 = scmp.eq.s32.totalorder %s37, 3
      %p69 = por %p67, %p68
      %p70 = scmp.ne.s32.totalorder %s59, %s60
      %p71 = scmp.eq.s32.totalorder %s37, 0
      %p72 = por %p70, %p71
      %p73 = scmp.ne.s32.totalorder %s59, %s60
      %p74 = scmp.eq.s32.totalorder %s38, 3
      %p75 = por %p73, %p74
      %p77 = scmp.ne.s32.totalorder %s60, %s76
      %p78 = scmp.eq.s32.totalorder %s38, 0
      %p79 = por %p77, %p78
      %s80 = ssub.s32 %s39, %s51
      %s81 = ssub.s32 %s40, %s47
      %s82 = sor.u32 %s80, %s81
      %p83 = scmp.eq.s32.totalorder %s82, 0
      %s85 = sadd.s32 %s84, 1
      %s86 = scalar_select %p83, %s84, %s85
      %p89 = pneg %p83
      %p90 = scmp.eq.s32.totalorder %s32, 3
      %p91 = por %p89, %p90
      %p92 = scmp.ne.s32.totalorder %s84, %s87
      %p93 = scmp.eq.s32.totalorder %s32, 0
      %p94 = por %p92, %p93
      %p95 = scmp.ne.s32.totalorder %s84, %s87
      %p96 = scmp.eq.s32.totalorder %s37, 3
      %p97 = por %p95, %p96
      %p98 = scmp.ne.s32.totalorder %s87, %s88
      %p99 = scmp.eq.s32.totalorder %s37, 0
      %p100 = por %p98, %p99
      %p101 = scmp.ne.s32.totalorder %s87, %s88
      %p102 = scmp.eq.s32.totalorder %s38, 3
      %p103 = por %p101, %p102
      %p105 = scmp.ne.s32.totalorder %s88, %s104
      %p106 = scmp.eq.s32.totalorder %s38, 0
      %p107 = por %p105, %p106
      %s109 = sadd.s32 %s108, 1
      %p112 = scmp.eq.s32.totalorder %s32, 3
      %p113 = scmp.ne.s32.totalorder %s108, %s110
      %p114 = scmp.eq.s32.totalorder %s32, 0
      %p115 = por %p113, %p114
      %p116 = scmp.ne.s32.totalorder %s108, %s110
      %p117 = scmp.eq.s32.totalorder %s37, 3
      %p118 = por %p116, %p117
      %p119 = scmp.ne.s32.totalorder %s110, %s111
      %p120 = scmp.eq.s32.totalorder %s37, 0
      %p121 = por %p119, %p120
      %p122 = scmp.ne.s32.totalorder %s110, %s111
      %p123 = scmp.eq.s32.totalorder %s38, 3
      %p124 = por %p122, %p123
      %p126 = scmp.ne.s32.totalorder %s111, %s125
      %p127 = scmp.eq.s32.totalorder %s38, 0
      %p128 = por %p126, %p127
      %s130 = sadd.s32 %s129, 1
      %p133 = scmp.eq.s32.totalorder %s32, 3
      %p134 = scmp.ne.s32.totalorder %s129, %s131
      %p135 = scmp.eq.s32.totalorder %s32, 0
      %p136 = por %p134, %p135
      %p137 = scmp.ne.s32.totalorder %s129, %s131
      %p138 = scmp.eq.s32.totalorder %s37, 3
      %p139 = por %p137, %p138
      %p140 = scmp.ne.s32.totalorder %s131, %s132
      %p141 = scmp.eq.s32.totalorder %s37, 0
      %p142 = por %p140, %p141
      %p143 = scmp.ne.s32.totalorder %s131, %s132
      %p144 = scmp.eq.s32.totalorder %s38, 3
      %p145 = por %p143, %p144
      %p147 = scmp.ne.s32.totalorder %s132, %s146
      %p148 = scmp.eq.s32.totalorder %s38, 0
      %p149 = por %p147, %p148
      %s151 = sadd.s32 %s150, 1
      %p154 = scmp.eq.s32.totalorder %s32, 3
      %p155 = scmp.ne.s32.totalorder %s150, %s152
      %p156 = scmp.eq.s32.totalorder %s32, 0
      %p157 = por %p155, %p156
      %p158 = scmp.ne.s32.totalorder %s150, %s152
      %p159 = scmp.eq.s32.totalorder %s37, 3
      %p160 = por %p158, %p159
      %p161 = scmp.ne.s32.totalorder %s152, %s153
      %p162 = scmp.eq.s32.totalorder %s37, 0
      %p163 = por %p161, %p162
      %p164 = scmp.ne.s32.totalorder %s152, %s153
      %p165 = scmp.eq.s32.totalorder %s38, 3
      %p166 = por %p164, %p165
      %p168 = scmp.ne.s32.totalorder %s153, %s167
      %p169 = scmp.eq.s32.totalorder %s38, 0
      %p170 = por %p168, %p169
      %s172 = sadd.s32 %s171, 1
      %p175 = scmp.eq.s32.totalorder %s32, 3
      %p176 = scmp.ne.s32.totalorder %s171, %s173
      %p177 = scmp.eq.s32.totalorder %s32, 0
      %p178 = por %p176, %p177
      %p179 = scmp.ne.s32.totalorder %s171, %s173
      %p180 = scmp.eq.s32.totalorder %s37, 3
      %p181 = por %p179, %p180
      %p182 = scmp.ne.s32.totalorder %s173, %s174
      %p183 = scmp.eq.s32.totalorder %s37, 0
      %p184 = por %p182, %p183
      %p185 = scmp.ne.s32.totalorder %s173, %s174
      %p186 = scmp.eq.s32.totalorder %s38, 3
      %p187 = por %p185, %p186
      %p189 = scmp.ne.s32.totalorder %s174, %s188
      %p190 = scmp.eq.s32.totalorder %s38, 0
      %p191 = por %p189, %p190
      %s193 = sadd.s32 %s192, 1
      %p196 = scmp.eq.s32.totalorder %s32, 3
      %p197 = scmp.ne.s32.totalorder %s192, %s194
      %p198 = scmp.eq.s32.totalorder %s32, 0
      %p199 = por %p197, %p198
      %p200 = scmp.ne.s32.totalorder %s192, %s194
      %p201 = scmp.eq.s32.totalorder %s37, 3
      %p202 = por %p200, %p201
      %p203 = scmp.ne.s32.totalorder %s194, %s195
      %p204 = scmp.eq.s32.totalorder %s37, 0
      %p205 = por %p203, %p204
      %p206 = scmp.ne.s32.totalorder %s194, %s195
      %p207 = scmp.eq.s32.totalorder %s38, 3
      %p208 = por %p206, %p207
      %p210 = scmp.ne.s32.totalorder %s195, %s209
      %p211 = scmp.eq.s32.totalorder %s38, 0
      %p212 = por %p210, %p211
      %s214 = sadd.s32 %s213, 1
      %p217 = scmp.eq.s32.totalorder %s32, 3
      %p218 = scmp.ne.s32.totalorder %s213, %s215
      %p219 = scmp.eq.s32.totalorder %s32, 0
      %p220 = por %p218, %p219
      %p221 = scmp.ne.s32.totalorder %s213, %s215
      %p222 = scmp.eq.s32.totalorder %s37, 3
      %p223 = por %p221, %p222
      %p224 = scmp.ne.s32.totalorder %s215, %s216
      %p225 = scmp.eq.s32.totalorder %s37, 0
      %p226 = por %p224, %p225
      %p227 = scmp.ne.s32.totalorder %s215, %s216
      %p228 = scmp.eq.s32.totalorder %s38, 3
      %p229 = por %p227, %p228
      %p231 = scmp.ne.s32.totalorder %s216, %s230
      %p232 = scmp.eq.s32.totalorder %s38, 0
      %p233 = por %p231, %p232
      %s235 = sadd.s32 %s234, 1
      %p238 = scmp.eq.s32.totalorder %s32, 3
      %p239 = scmp.ne.s32.totalorder %s234, %s236
      %p240 = scmp.eq.s32.totalorder %s32, 0
      %p241 = por %p239, %p240
      %p242 = scmp.ne.s32.totalorder %s234, %s236
      %p243 = scmp.eq.s32.totalorder %s37, 3
      %p244 = por %p242, %p243
      %p245 = scmp.ne.s32.totalorder %s236, %s237
      %p246 = scmp.eq.s32.totalorder %s37, 0
      %p247 = por %p245, %p246
      %p248 = scmp.ne.s32.totalorder %s236, %s237
      %p249 = scmp.eq.s32.totalorder %s38, 3
      %p250 = por %p248, %p249
      %p252 = scmp.ne.s32.totalorder %s237, %s251
      %p253 = scmp.eq.s32.totalorder %s38, 0
      %p254 = por %p252, %p253
      %s256 = sadd.s32 %s255, 1
      %p259 = scmp.eq.s32.totalorder %s32, 3
      %p260 = scmp.ne.s32.totalorder %s255, %s257
      %p261 = scmp.eq.s32.totalorder %s32, 0
      %p262 = por %p260, %p261
      %p263 = scmp.ne.s32.totalorder %s255, %s257
      %p264 = scmp.eq.s32.totalorder %s37, 3
      %p265 = por %p263, %p264
      %p266 = scmp.ne.s32.totalorder %s257, %s258
      %p267 = scmp.eq.s32.totalorder %s37, 0
      %p268 = por %p266, %p267
      %p269 = scmp.ne.s32.totalorder %s257, %s258
      %p270 = scmp.eq.s32.totalorder %s38, 3
      %p271 = por %p269, %p270
      %p273 = scmp.ne.s32.totalorder %s258, %s272
      %p274 = scmp.eq.s32.totalorder %s38, 0
      %p275 = por %p273, %p274
      %s276 = ssub.s32 %s39, %s51
      %s277 = ssub.s32 %s40, %s47
      %s278 = sor.u32 %s276, %s277
      %p279 = scmp.eq.s32.totalorder %s278, 0
      %s281 = sadd.s32 %s280, 1
      %s282 = scalar_select %p279, %s280, %s281
      %p285 = pneg %p279
      %p286 = scmp.eq.s32.totalorder %s32, 3
      %p287 = por %p285, %p286
      %p288 = scmp.ne.s32.totalorder %s280, %s283
      %p289 = scmp.eq.s32.totalorder %s32, 0
      %p290 = por %p288, %p289
      %p291 = scmp.ne.s32.totalorder %s280, %s283
      %p292 = scmp.eq.s32.totalorder %s37, 3
      %p293 = por %p291, %p292
      %p294 = scmp.ne.s32.totalorder %s283, %s284
      %p295 = scmp.eq.s32.totalorder %s37, 0
      %p296 = por %p294, %p295
      %p297 = scmp.ne.s32.totalorder %s283, %s284
      %p298 = scmp.eq.s32.totalorder %s38, 3
      %p299 = por %p297, %p298
      %p301 = scmp.ne.s32.totalorder %s284, %s300
      %p302 = scmp.eq.s32.totalorder %s38, 0
      %p303 = por %p301, %p302
      %s304 = ssub.s32 %s39, %s51
      %s305 = ssub.s32 %s40, %s47
      %s306 = sor.u32 %s304, %s305
      %p307 = scmp.eq.s32.totalorder %s306, 0
      %s309 = sadd.s32 %s308, 1
      %s310 = scalar_select %p307, %s308, %s309
      %p313 = pneg %p307
      %p314 = scmp.eq.s32.totalorder %s32, 3
      %p315 = por %p313, %p314
      %p316 = scmp.ne.s32.totalorder %s308, %s311
      %p317 = scmp.eq.s32.totalorder %s32, 0
      %p318 = por %p316, %p317
      %p319 = scmp.ne.s32.totalorder %s308, %s311
      %p320 = scmp.eq.s32.totalorder %s37, 3
      %p321 = por %p319, %p320
      %p322 = scmp.ne.s32.totalorder %s311, %s312
      %p323 = scmp.eq.s32.totalorder %s37, 0
      %p324 = por %p322, %p323
      %p325 = scmp.ne.s32.totalorder %s311, %s312
      %p326 = scmp.eq.s32.totalorder %s38, 3
      %p327 = por %p325, %p326
      %p329 = scmp.ne.s32.totalorder %s312, %s328
      %p330 = scmp.eq.s32.totalorder %s38, 0
      %p331 = por %p329, %p330
      %s332 = ssub.s32 %s39, %s51
      %s333 = ssub.s32 %s40, %s47
      %s334 = sor.u32 %s332, %s333
      %p335 = scmp.eq.s32.totalorder %s334, 0
      %s337 = sadd.s32 %s336, 1
      %s338 = scalar_select %p335, %s336, %s337
      %p341 = pneg %p335
      %p342 = scmp.eq.s32.totalorder %s32, 3
      %p343 = por %p341, %p342
      %p344 = scmp.ne.s32.totalorder %s336, %s339
      %p345 = scmp.eq.s32.totalorder %s32, 0
      %p346 = por %p344, %p345
      %p347 = scmp.ne.s32.totalorder %s336, %s339
      %p348 = scmp.eq.s32.totalorder %s37, 3
      %p349 = por %p347, %p348
      %p350 = scmp.ne.s32.totalorder %s339, %s340
      %p351 = scmp.eq.s32.totalorder %s37, 0
      %p352 = por %p350, %p351
      %p353 = scmp.ne.s32.totalorder %s339, %s340
      %p354 = scmp.eq.s32.totalorder %s38, 3
      %p355 = por %p353, %p354
      %p357 = scmp.ne.s32.totalorder %s340, %s356
      %p358 = scmp.eq.s32.totalorder %s38, 0
      %p359 = por %p357, %p358
      %p360 = scmp.le.s32.totalorder 1, %s32
      %p361 = scmp.lt.s32.totalorder %s32, 5
      %p362 = pnand %p360, %p361
      %p363 = pneg %p362
      // Predicated region
      $region9: #{tpu_custom_call.1} parent=5 // pred_check
        _
      $region10: #{tpu_custom_call.1} parent=5 // pred_check_branch
        %365 = sbr.rel (%p362) target = $region12
      $region11: #{tpu_custom_call.1} parent=5 // pred_region
        %s366 = ssub.s32 %s32, 1
        // Predicated region
        $region13: #{tpu_custom_call.1} parent=11 // pred_check
          %p367 = pneg %p121
        $region14: #{tpu_custom_call.1} parent=11 // pred_check_branch
          %369 = sbr.rel (%p367) target = $region16
        $region15: #{tpu_custom_call.1} parent=11 // pred_region
          _
        $region16: #{tpu_custom_call.1} parent=11 // pred_fallthru
          _
        // Predicated region
        $region17: #{tpu_custom_call.1} parent=11 // pred_check
          %p370 = pneg %p142
        $region18: #{tpu_custom_call.1} parent=11 // pred_check_branch
          %372 = sbr.rel (%p370) target = $region20
        $region19: #{tpu_custom_call.1} parent=11 // pred_region
          _
        $region20: #{tpu_custom_call.1} parent=11 // pred_fallthru
          _
        // Predicated region
        $region21: #{tpu_custom_call.1} parent=11 // pred_check
          %p373 = pneg %p163
        $region22: #{tpu_custom_call.1} parent=11 // pred_check_branch
          %375 = sbr.rel (%p373) target = $region24
        $region23: #{tpu_custom_call.1} parent=11 // pred_region
          %s377 = ssub.s32 1024, 1024
          %378 = vsyncadd [#allocation6], %s377
          %s379 = sshll.u32 [#allocation7], 4
          %s380 = int_to_ptr.vmem [resolvable:$true] %s379
          %385 = dma.hbm_to_vmem [thread:$0]  %s4, 1024, %s380, [#allocation6], 64, 64, 4
        $region24: #{tpu_custom_call.1} parent=11 // pred_fallthru
          _
        // Predicated region
        $region25: #{tpu_custom_call.1} parent=11 // pred_check
          %p386 = pneg %p184
        $region26: #{tpu_custom_call.1} parent=11 // pred_check_branch
          %388 = sbr.rel (%p386) target = $region28
        $region27: #{tpu_custom_call.1} parent=11 // pred_region
          %s390 = ssub.s32 1024, 1024
          %391 = vsyncadd [#allocation9], %s390
          %s392 = sshll.u32 [#allocation8], 4
          %s393 = int_to_ptr.vmem [resolvable:$true] %s392
          %398 = dma.hbm_to_vmem [thread:$0]  %s5, 1024, %s393, [#allocation9], 64, 64, 4
        $region28: #{tpu_custom_call.1} parent=11 // pred_fallthru
          _
        // Predicated region
        $region29: #{tpu_custom_call.1} parent=11 // pred_check
          %p399 = pneg %p205
        $region30: #{tpu_custom_call.1} parent=11 // pred_check_branch
          %401 = sbr.rel (%p399) target = $region32
        $region31: #{tpu_custom_call.1} parent=11 // pred_region
          %s403 = ssub.s32 1024, 1024
          %404 = vsyncadd [#allocation9], %s403
          %s405 = sshll.u32 [#allocation10], 4
          %s406 = int_to_ptr.vmem [resolvable:$true] %s405
          %411 = dma.hbm_to_vmem [thread:$0]  %s6, 1024, %s406, [#allocation9], 64, 64, 4
        $region32: #{tpu_custom_call.1} parent=11 // pred_fallthru
          _
        // Predicated region
        $region33: #{tpu_custom_call.1} parent=11 // pred_check
          %p412 = pneg %p226
        $region34: #{tpu_custom_call.1} parent=11 // pred_check_branch
          %414 = sbr.rel (%p412) target = $region36
        $region35: #{tpu_custom_call.1} parent=11 // pred_region
          _
        $region36: #{tpu_custom_call.1} parent=11 // pred_fallthru
          _
        // Predicated region
        $region37: #{tpu_custom_call.1} parent=11 // pred_check
          %p415 = pneg %p247
        $region38: #{tpu_custom_call.1} parent=11 // pred_check_branch
          %417 = sbr.rel (%p415) target = $region40
        $region39: #{tpu_custom_call.1} parent=11 // pred_region
          _
        $region40: #{tpu_custom_call.1} parent=11 // pred_fallthru
          _
        // Predicated region
        $region41: #{tpu_custom_call.1} parent=11 // pred_check
          %p418 = pneg %p268
        $region42: #{tpu_custom_call.1} parent=11 // pred_check_branch
          %420 = sbr.rel (%p418) target = $region44
        $region43: #{tpu_custom_call.1} parent=11 // pred_region
          _
        $region44: #{tpu_custom_call.1} parent=11 // pred_fallthru
          _
      $region12: #{tpu_custom_call.1} parent=5 // pred_fallthru
        _
      %p421 = scmp.lt.s32.totalorder %s32, 4
      // Predicated region
      $region45: #{tpu_custom_call.1} parent=5 // pred_check
        %p422 = pneg %p421
      $region46: #{tpu_custom_call.1} parent=5 // pred_check_branch
        %424 = sbr.rel (%p422) target = $region48
      $region47: #{tpu_custom_call.1} parent=5 // pred_region
        // Predicated region
        $region49: #{tpu_custom_call.1} parent=47 // pred_check
          %p425 = pneg %p66
        $region50: #{tpu_custom_call.1} parent=47 // pred_check_branch
          %427 = sbr.rel (%p425) target = $region52
        $region51: #{tpu_custom_call.1} parent=47 // pred_region
          %s428 = sand.u32 %s56, 1
          %s429 = scalar_lea.sflag [#allocation3], %s428
          %s430 = sand.u32 %s56, 1
          %s431 = smul.addr %s430, 16
          %s432 = scalar_lea.vmem [#allocation2], %s431
          %s433 = smul.u32 2, %s40
          %s435 = ssub.s32 256, 256
          %436 = vsyncadd %s429, %s435
          %s437 = smul.addr %s39, 4
          %s438 = sadd.s32 %s433, %s437
          %s439 = smul.addr %s438, 128
          %s440 = scalar_lea.hbm %s0, %s439
          %s441 = sshll.u32 %s432, 4
          %s442 = int_to_ptr.vmem [resolvable:$true] %s441
          %447 = dma.hbm_to_vmem [thread:$0]  %s440, 256, %s442, %s429, 128, 128, 8
        $region52: #{tpu_custom_call.1} parent=47 // pred_fallthru
          _
        // Predicated region
        $region53: #{tpu_custom_call.1} parent=47 // pred_check
          %p448 = pneg %p94
        $region54: #{tpu_custom_call.1} parent=47 // pred_check_branch
          %450 = sbr.rel (%p448) target = $region56
        $region55: #{tpu_custom_call.1} parent=47 // pred_region
          %s451 = sand.u32 %s32, 1
          %s452 = scalar_lea.sflag [#allocation6], %s451
          %s453 = sand.u32 %s84, 1
          %s454 = smul.addr %s453, 16
          %s455 = scalar_lea.vmem [#allocation5], %s454
          %s456 = smul.u32 2, %s40
          %s458 = ssub.s32 256, 256
          %459 = vsyncadd %s452, %s458
          %s460 = smul.addr %s39, 4
          %s461 = sadd.s32 %s456, %s460
          %s462 = smul.addr %s461, 128
          %s463 = scalar_lea.hbm %s1, %s462
          %s464 = sshll.u32 %s455, 4
          %s465 = int_to_ptr.vmem [resolvable:$true] %s464
          %470 = dma.hbm_to_vmem [thread:$0]  %s463, 256, %s465, %s452, 128, 128, 8
        $region56: #{tpu_custom_call.1} parent=47 // pred_fallthru
          _
      $region48: #{tpu_custom_call.1} parent=5 // pred_fallthru
        _
      %p471 = scmp.le.s32.totalorder 1, %s32
      %p472 = scmp.lt.s32.totalorder %s32, 5
      %p473 = pnand %p471, %p472
      %p474 = pneg %p473
      // Predicated region
      $region57: #{tpu_custom_call.1} parent=5 // pred_check
        _
      $region58: #{tpu_custom_call.1} parent=5 // pred_check_branch
        %476 = sbr.rel (%p473) target = $region60
      $region59: #{tpu_custom_call.1} parent=5 // pred_region
        %s477 = ssub.s32 %s32, 1
        %s478 = sand.u32 %s59, 1
        %s479 = scalar_lea.sflag [#allocation3], %s478
        %s480 = sand.u32 %s59, 1
        %s481 = smul.addr %s480, 16
        %s482 = scalar_lea.vmem [#allocation2], %s481
        // Predicated region
        $region61: #{tpu_custom_call.1} parent=59 // pred_check
          %p483 = pneg %p72
        $region62: #{tpu_custom_call.1} parent=59 // pred_check_branch
          %485 = sbr.rel (%p483) target = $region64
        $region63: #{tpu_custom_call.1} parent=59 // pred_region
          %486 = dma.done %s479, 256
        $region64: #{tpu_custom_call.1} parent=59 // pred_fallthru
          _
        %s487 = sand.u32 %s37, 1
        %s488 = scalar_lea.sflag [#allocation6], %s487
        %s489 = sand.u32 %s87, 1
        %s490 = smul.addr %s489, 16
        %s491 = scalar_lea.vmem [#allocation5], %s490
        // Predicated region
        $region65: #{tpu_custom_call.1} parent=59 // pred_check
          %p492 = pneg %p100
        $region66: #{tpu_custom_call.1} parent=59 // pred_check_branch
          %494 = sbr.rel (%p492) target = $region68
        $region67: #{tpu_custom_call.1} parent=59 // pred_region
          %495 = dma.done %s488, 256
        $region68: #{tpu_custom_call.1} parent=59 // pred_fallthru
          _
        // Predicated region
        $region69: #{tpu_custom_call.1} parent=59 // pred_check
          %p496 = pneg %p163
        $region70: #{tpu_custom_call.1} parent=59 // pred_check_branch
          %498 = sbr.rel (%p496) target = $region72
        $region71: #{tpu_custom_call.1} parent=59 // pred_region
          %499 = dma.done [#allocation6], 1024
        $region72: #{tpu_custom_call.1} parent=59 // pred_fallthru
          _
        // Predicated region
        $region73: #{tpu_custom_call.1} parent=59 // pred_check
          %p500 = pneg %p184
        $region74: #{tpu_custom_call.1} parent=59 // pred_check_branch
          %502 = sbr.rel (%p500) target = $region76
        $region75: #{tpu_custom_call.1} parent=59 // pred_region
          %503 = dma.done [#allocation9], 1024
        $region76: #{tpu_custom_call.1} parent=59 // pred_fallthru
          _
        // Predicated region
        $region77: #{tpu_custom_call.1} parent=59 // pred_check
          %p504 = pneg %p205
        $region78: #{tpu_custom_call.1} parent=59 // pred_check_branch
          %506 = sbr.rel (%p504) target = $region80
        $region79: #{tpu_custom_call.1} parent=59 // pred_region
          %507 = dma.done [#allocation9], 1024
        $region80: #{tpu_custom_call.1} parent=59 // pred_fallthru
          _
        %s508 = sand.u32 %s59, 1
        %s509 = scalar_lea.sflag [#allocation3], %s508
        %s510 = sand.u32 %s59, 1
        %s511 = smul.addr %s510, 16
        %s512 = scalar_lea.vmem [#allocation2], %s511
        %p513 = pneg %p72
        %p514 = pneg %p69
        %s515 = sand.u32 %s37, 1
        %s516 = scalar_lea.sflag [#allocation6], %s515
        %s517 = sand.u32 %s87, 1
        %s518 = smul.addr %s517, 16
        %s519 = scalar_lea.vmem [#allocation5], %s518
        %p520 = pneg %p100
        %p521 = pneg %p97
        %p522 = pneg %p121
        %p523 = pneg %p118
        %p524 = pneg %p142
        %p525 = pneg %p139
        %p526 = pneg %p163
        %p527 = pneg %p160
        %p528 = pneg %p184
        %p529 = pneg %p181
        %p530 = pneg %p205
        %p531 = pneg %p202
        %p532 = pneg %p226
        %p533 = pneg %p223
        %p534 = pneg %p247
        %p535 = pneg %p244
        %p536 = pneg %p268
        %p537 = pneg %p265
        %p538 = pneg %p296
        %p539 = pneg %p293
        %s540 = sand.u32 %s283, 1
        %s541 = scalar_lea.sflag [#allocation4], %s540
        %s542 = sand.u32 %s283, 1
        %s543 = smul.addr %s542, 32
        %s544 = scalar_lea.vmem [#allocation11], %s543
        %p545 = pneg %p324
        %p546 = pneg %p321
        %s547 = sand.u32 %s37, 1
        %s548 = scalar_lea.sflag [#allocation13], %s547
        %s549 = sand.u32 %s311, 1
        %s550 = smul.addr %s549, 32
        %s551 = scalar_lea.vmem [#allocation12], %s550
        %p552 = pneg %p352
        %p553 = pneg %p349
        %s554 = sand.u32 %s37, 1
        %s555 = scalar_lea.sflag [#allocation13], %s554
        %s556 = sand.u32 %s339, 1
        %s557 = smul.addr %s556, 32
        %s558 = scalar_lea.vmem [#allocation14], %s557
        %s559 = smul.u32 2, %s42
        %s560 = smul.u32 2, %s42
        %s561 = smul.u32 2, %s42
        %s562 = smul.u32 2, %s42
        %s563 = smul.u32 2, %s42
        %v565 = vld [vmem:[%s482] sm:$0xff]
        %v566 = vld [vmem:[%s482 + $0x8] sm:$0xff]
        %v567 = vld [vmem:[%s2] sm:$0x1]
        %v568 = vld [vmem:[%s3] sm:$0x1]
        %569 = vadd.xlane.f32.xlu0 %v565
        %v570 = vpop.xlane.xlu0 %569
        %571 = vadd.xlane.f32.xlu0 %v566
        %v572 = vpop.xlane.xlu0 %571
        %v573 = vrcp.pop 128.0
        %v574 = vmul.f32 %v570, %v573
        %v575 = vmul.f32 %v572, %v573
        %v576 = vsub.f32 %v565, %v574
        %v577 = vsub.f32 %v566, %v575
        %v578 = vmul.f32 %v576, %v576
        %v579 = vmul.f32 %v577, %v577
        %580 = vadd.xlane.f32.xlu0 %v578
        %v581 = vpop.xlane.xlu0 %580
        %582 = vadd.xlane.f32.xlu0 %v579
        %v583 = vpop.xlane.xlu0 %582
        %v584 = vmul.f32 %v581, %v573
        %v585 = vmul.f32 %v583, %v573
        %v586 = vadd.f32 %v584, 1e-05
        %v587 = vadd.f32 %v585, 1e-05
        %v588 = vrsqrt.pop %v586
        %v589 = vrsqrt.pop %v587
        %v590 = vmul.f32 %v576, %v588
        %v591 = vmul.f32 %v577, %v589
        %v593 = vlaneseq
        %v594 = vshrl.u32 %v593, 7
        %v595 = vsub.s32 0, %v594
        %v596 = vrot.slane %v567, %v595
        %v598 = vmul.f32 %v590, %v596
        %v599 = vmul.f32 %v591, %v596
        %v601 = vlaneseq
        %v602 = vshrl.u32 %v601, 7
        %v603 = vsub.s32 0, %v602
        %v604 = vrot.slane %v568, %v603
        %v606 = vadd.f32 %v598, %v604
        %v607 = vadd.f32 %v599, %v604
        %v608 = vld [vmem:[%s491] sm:$0xff]
        %v609 = vld [vmem:[%s491 + $0x8] sm:$0xff]
        %v610 = vadd.f32 %v606, %v608
        %v611 = vadd.f32 %v607, %v609
        %v612 = vpack.c.bf16 %v611, %v610
        %v613 = vpack.c.bf16 %v607, %v606
        %v614 = vld [vmem:[#allocation7] sm:$0xf]
        %v615 = vld [vmem:[#allocation7 + $0x4] sm:$0xf]
        %v616 = vld [vmem:[#allocation7 + $0x8] sm:$0xf]
        %v617 = vld [vmem:[#allocation7 + $0xc] sm:$0xf]
        %v618 = vld [vmem:[#allocation7 + $0x10] sm:$0xf]
        %v619 = vld [vmem:[#allocation7 + $0x14] sm:$0xf]
        %v620 = vld [vmem:[#allocation7 + $0x18] sm:$0xf]
        %v621 = vld [vmem:[#allocation7 + $0x1c] sm:$0xf]
        %v622 = vld [vmem:[#allocation7 + $0x20] sm:$0xf]
        %v623 = vld [vmem:[#allocation7 + $0x24] sm:$0xf]
        %v624 = vld [vmem:[#allocation7 + $0x28] sm:$0xf]
        %v625 = vld [vmem:[#allocation7 + $0x2c] sm:$0xf]
        %v626 = vld [vmem:[#allocation7 + $0x30] sm:$0xf]
        %v627 = vld [vmem:[#allocation7 + $0x34] sm:$0xf]
        %v628 = vld [vmem:[#allocation7 + $0x38] sm:$0xf]
        %v629 = vld [vmem:[#allocation7 + $0x3c] sm:$0xf]
        %v630 = vld [vmem:[%s7] sm:$0x1]
        %v632 = vlaneseq
        %v633 = vshrl.u32 %v632, 7
        %v634 = vsub.s32 0, %v633
        %v635 = vrot.slane %v630, %v634
        %v653 = vunpack.c.l.b16 %v614
        %v654 = vunpack.c.l.b16 %v615
        %v655 = vunpack.c.l.b16 %v616
        %v656 = vunpack.c.l.b16 %v617
        %v657 = vunpack.c.l.b16 %v618
        %v658 = vunpack.c.l.b16 %v619
        %v659 = vunpack.c.l.b16 %v620
        %v660 = vunpack.c.l.b16 %v621
        %v661 = vunpack.c.l.b16 %v622
        %v662 = vunpack.c.l.b16 %v623
        %v663 = vunpack.c.l.b16 %v624
        %v664 = vunpack.c.l.b16 %v625
        %v665 = vunpack.c.l.b16 %v626
        %v666 = vunpack.c.l.b16 %v627
        %v667 = vunpack.c.l.b16 %v628
        %v668 = vunpack.c.l.b16 %v629
        %v669 = vpack.c.b16 %v654, %v653
        %v670 = vpack.c.b16 %v656, %v655
        %v671 = vpack.c.b16 %v658, %v657
        %v672 = vpack.c.b16 %v660, %v659
        %v673 = vpack.c.b16 %v662, %v661
        %v674 = vpack.c.b16 %v664, %v663
        %v675 = vpack.c.b16 %v666, %v665
        %v676 = vpack.c.b16 %v668, %v667
        %685 = vmatprep.subr.bf16.mxu0 0
        %686 = vmatpush1.bf16.msra.mxu0 %v669
        %687 = vmatprep.subr.bf16.mxu0 0
        %688 = vmatpush1.bf16.msra.mxu0 %v670
        %689 = vmatprep.subr.bf16.mxu0 0
        %690 = vmatpush1.bf16.msra.mxu0 %v671
        %691 = vmatprep.subr.bf16.mxu0 0
        %692 = vmatpush1.bf16.msra.mxu0 %v672
        %693 = vmatprep.subr.bf16.mxu0 0
        %694 = vmatpush1.bf16.msra.mxu0 %v673
        %695 = vmatprep.subr.bf16.mxu0 0
        %696 = vmatpush1.bf16.msra.mxu0 %v674
        %697 = vmatprep.subr.bf16.mxu0 0
        %698 = vmatpush1.bf16.msra.mxu0 %v675
        %699 = vmatprep.subr.bf16.mxu0 0
        %700 = vmatpush1.bf16.msra.mxu0 %v676
        %701 = vmatprep.subr.bf16.mxu0 0
        %702 = vmatpush1.bf16.msra.mxu0 0
        %703 = vmatprep.subr.bf16.mxu0 0
        %704 = vmatpush1.bf16.msra.mxu0 0
        %705 = vmatprep.subr.bf16.mxu0 0
        %706 = vmatpush1.bf16.msra.mxu0 0
        %707 = vmatprep.subr.bf16.mxu0 0
        %708 = vmatpush1.bf16.msra.mxu0 0
        %709 = vmatprep.subr.bf16.mxu0 0
        %710 = vmatpush1.bf16.msra.mxu0 0
        %711 = vmatprep.subr.bf16.mxu0 0
        %712 = vmatpush1.bf16.msra.mxu0 0
        %713 = vmatprep.subr.bf16.mxu0 0
        %714 = vmatpush1.bf16.msra.mxu0 0
        %715 = vmatprep.subr.bf16.mxu0 0
        %716 = vmatpush1.bf16.msra.mxu0 0
        %717 = vmatprep.mubr.bf16.mxu0 0
        %718 = vmatmul.mubr.bf16.gmra.mrb[0].mxu0 %v612
        %v719 = vpop.f32.mrb[0].mxu0
        %v720 = vadd.f32 %v635, %v719
        %v721 = vpop.f32.mrb[0].mxu0
        %v722 = vpop.f32.mrb[0].mxu0
        %v723 = vadd.f32 %v635, %v722
        %v724 = vpop.f32.mrb[0].mxu0
        %725 = vdwg.mxu0
        %728 = vrot.lane.b32.xlu0 %v720, 96
        %v729 = vpop.permute.xlu0 %728
        %730 = vrot.lane.b32.xlu0 %v723, 96
        %v731 = vpop.permute.xlu0 %730
        %734 = vrot.lane.b32.xlu0 %v720, 64
        %v735 = vpop.permute.xlu0 %734
        %736 = vrot.lane.b32.xlu0 %v723, 64
        %v737 = vpop.permute.xlu0 %736
        %740 = vrot.lane.b32.xlu0 %v720, 32
        %v741 = vpop.permute.xlu0 %740
        %742 = vrot.lane.b32.xlu0 %v723, 32
        %v743 = vpop.permute.xlu0 %742
        %v746 = vcombine.low %v720, %v735
        %v747 = vcombine.high %v720, %v735
        %v749 = vunpack.c.l.s4 1983009808
        %v750 = vunpack.c.0.s8 %v749
        %v751 = vlaneseq
        %v752 = vshrl.u32 %v751, 7
        %v753 = vsub.s32 %v750, %v752
        %v754 = vrot.slane %v746, %v753
        %v756 = vunpack.c.l.s4 1983009808
        %v757 = vunpack.c.0.s8 %v756
        %v758 = vlaneseq
        %v759 = vshrl.u32 %v758, 7
        %v760 = vsub.s32 %v757, %v759
        %v761 = vrot.slane %v747, %v760
        %v762 = vcombine.low %v729, %v741
        %v763 = vcombine.high %v729, %v741
        %v765 = vunpack.c.l.s4 1983009808
        %v766 = vunpack.c.0.s8 %v765
        %v767 = vlaneseq
        %v768 = vshrl.u32 %v767, 7
        %v769 = vsub.s32 %v766, %v768
        %v770 = vrot.slane %v762, %v769
        %v772 = vunpack.c.l.s4 1983009808
        %v773 = vunpack.c.0.s8 %v772
        %v774 = vlaneseq
        %v775 = vshrl.u32 %v774, 7
        %v776 = vsub.s32 %v773, %v775
        %v777 = vrot.slane %v763, %v776
        %v778 = vcombine.low %v754, %v770
        %v779 = vcombine.high %v754, %v770
        %v781 = vunpack.c.l.s4 1934713408
        %v782 = vunpack.c.0.s8 %v781
        %v783 = vlaneseq
        %v784 = vshrl.u32 %v783, 7
        %v785 = vsub.s32 %v782, %v784
        %v786 = vrot.slane %v778, %v785
        %v788 = vunpack.c.l.s4 1934713408
        %v789 = vunpack.c.0.s8 %v788
        %v790 = vlaneseq
        %v791 = vshrl.u32 %v790, 7
        %v792 = vsub.s32 %v789, %v791
        %v793 = vrot.slane %v779, %v792
        %v794 = vcombine.low %v761, %v777
        %v795 = vcombine.high %v761, %v777
        %v797 = vunpack.c.l.s4 1934713408
        %v798 = vunpack.c.0.s8 %v797
        %v799 = vlaneseq
        %v800 = vshrl.u32 %v799, 7
        %v801 = vsub.s32 %v798, %v800
        %v802 = vrot.slane %v794, %v801
        %v804 = vunpack.c.l.s4 1934713408
        %v805 = vunpack.c.0.s8 %v804
        %v806 = vlaneseq
        %v807 = vshrl.u32 %v806, 7
        %v808 = vsub.s32 %v805, %v807
        %v809 = vrot.slane %v795, %v808
        %v810 = vcombine.high %v786, 0.0
        %v811 = vcombine.high %v793, 0.0
        %v812 = vcombine.high %v802, 0.0
        %v813 = vcombine.high %v809, 0.0
        %v814 = vcombine.low %v723, %v737
        %v815 = vcombine.high %v723, %v737
        %v817 = vunpack.c.l.s4 1983009808
        %v818 = vunpack.c.0.s8 %v817
        %v819 = vlaneseq
        %v820 = vshrl.u32 %v819, 7
        %v821 = vsub.s32 %v818, %v820
        %v822 = vrot.slane %v814, %v821
        %v824 = vunpack.c.l.s4 1983009808
        %v825 = vunpack.c.0.s8 %v824
        %v826 = vlaneseq
        %v827 = vshrl.u32 %v826, 7
        %v828 = vsub.s32 %v825, %v827
        %v829 = vrot.slane %v815, %v828
        %v830 = vcombine.low %v731, %v743
        %v831 = vcombine.high %v731, %v743
        %v833 = vunpack.c.l.s4 1983009808
        %v834 = vunpack.c.0.s8 %v833
        %v835 = vlaneseq
        %v836 = vshrl.u32 %v835, 7
        %v837 = vsub.s32 %v834, %v836
        %v838 = vrot.slane %v830, %v837
        %v840 = vunpack.c.l.s4 1983009808
        %v841 = vunpack.c.0.s8 %v840
        %v842 = vlaneseq
        %v843 = vshrl.u32 %v842, 7
        %v844 = vsub.s32 %v841, %v843
        %v845 = vrot.slane %v831, %v844
        %v846 = vcombine.low %v822, %v838
        %v847 = vcombine.high %v822, %v838
        %v849 = vunpack.c.l.s4 1934713408
        %v850 = vunpack.c.0.s8 %v849
        %v851 = vlaneseq
        %v852 = vshrl.u32 %v851, 7
        %v853 = vsub.s32 %v850, %v852
        %v854 = vrot.slane %v846, %v853
        %v856 = vunpack.c.l.s4 1934713408
        %v857 = vunpack.c.0.s8 %v856
        %v858 = vlaneseq
        %v859 = vshrl.u32 %v858, 7
        %v860 = vsub.s32 %v857, %v859
        %v861 = vrot.slane %v847, %v860
        %v862 = vcombine.low %v829, %v845
        %v863 = vcombine.high %v829, %v845
        %v865 = vunpack.c.l.s4 1934713408
        %v866 = vunpack.c.0.s8 %v865
        %v867 = vlaneseq
        %v868 = vshrl.u32 %v867, 7
        %v869 = vsub.s32 %v866, %v868
        %v870 = vrot.slane %v862, %v869
        %v872 = vunpack.c.l.s4 1934713408
        %v873 = vunpack.c.0.s8 %v872
        %v874 = vlaneseq
        %v875 = vshrl.u32 %v874, 7
        %v876 = vsub.s32 %v873, %v875
        %v877 = vrot.slane %v863, %v876
        %v878 = vcombine.high %v854, 0.0
        %v879 = vcombine.high %v861, 0.0
        %v880 = vcombine.high %v870, 0.0
        %v881 = vcombine.high %v877, 0.0
        %v882 = vcombine.low %v786, %v793
        %v884 = vunpack.c.l.s4 1983009808
        %v885 = vunpack.c.0.s8 %v884
        %v886 = vlaneseq
        %v887 = vshrl.u32 %v886, 7
        %v888 = vsub.s32 %v885, %v887
        %v889 = vrot.slane %v882, %v888
        %v890 = vcombine.low %v810, %v811
        %v892 = vunpack.c.l.s4 1983009808
        %v893 = vunpack.c.0.s8 %v892
        %v894 = vlaneseq
        %v895 = vshrl.u32 %v894, 7
        %v896 = vsub.s32 %v893, %v895
        %v897 = vrot.slane %v890, %v896
        %v898 = vcombine.low %v802, %v809
        %v900 = vunpack.c.l.s4 1983009808
        %v901 = vunpack.c.0.s8 %v900
        %v902 = vlaneseq
        %v903 = vshrl.u32 %v902, 7
        %v904 = vsub.s32 %v901, %v903
        %v905 = vrot.slane %v898, %v904
        %v906 = vcombine.low %v812, %v813
        %v908 = vunpack.c.l.s4 1983009808
        %v909 = vunpack.c.0.s8 %v908
        %v910 = vlaneseq
        %v911 = vshrl.u32 %v910, 7
        %v912 = vsub.s32 %v909, %v911
        %v913 = vrot.slane %v906, %v912
        %v914 = vcombine.low %v889, %v897
        %v915 = vcombine.high %v889, %v897
        %v917 = vunpack.c.l.s4 1934713408
        %v918 = vunpack.c.0.s8 %v917
        %v919 = vlaneseq
        %v920 = vshrl.u32 %v919, 7
        %v921 = vsub.s32 %v918, %v920
        %v922 = vrot.slane %v914, %v921
        %v924 = vunpack.c.l.s4 1934713408
        %v925 = vunpack.c.0.s8 %v924
        %v926 = vlaneseq
        %v927 = vshrl.u32 %v926, 7
        %v928 = vsub.s32 %v925, %v927
        %v929 = vrot.slane %v915, %v928
        %v930 = vcombine.low %v905, %v913
        %v931 = vcombine.high %v905, %v913
        %v933 = vunpack.c.l.s4 1934713408
        %v934 = vunpack.c.0.s8 %v933
        %v935 = vlaneseq
        %v936 = vshrl.u32 %v935, 7
        %v937 = vsub.s32 %v934, %v936
        %v938 = vrot.slane %v930, %v937
        %v940 = vunpack.c.l.s4 1934713408
        %v941 = vunpack.c.0.s8 %v940
        %v942 = vlaneseq
        %v943 = vshrl.u32 %v942, 7
        %v944 = vsub.s32 %v941, %v943
        %v945 = vrot.slane %v931, %v944
        %v946 = vcombine.low %v922, %v938
        %v947 = vcombine.high %v922, %v938
        %v948 = vcombine.low %v929, %v945
        %v949 = vcombine.high %v929, %v945
        %v950 = vcombine.low %v854, %v861
        %v952 = vunpack.c.l.s4 1983009808
        %v953 = vunpack.c.0.s8 %v952
        %v954 = vlaneseq
        %v955 = vshrl.u32 %v954, 7
        %v956 = vsub.s32 %v953, %v955
        %v957 = vrot.slane %v950, %v956
        %v958 = vcombine.low %v878, %v879
        %v960 = vunpack.c.l.s4 1983009808
        %v961 = vunpack.c.0.s8 %v960
        %v962 = vlaneseq
        %v963 = vshrl.u32 %v962, 7
        %v964 = vsub.s32 %v961, %v963
        %v965 = vrot.slane %v958, %v964
        %v966 = vcombine.low %v870, %v877
        %v968 = vunpack.c.l.s4 1983009808
        %v969 = vunpack.c.0.s8 %v968
        %v970 = vlaneseq
        %v971 = vshrl.u32 %v970, 7
        %v972 = vsub.s32 %v969, %v971
        %v973 = vrot.slane %v966, %v972
        %v974 = vcombine.low %v880, %v881
        %v976 = vunpack.c.l.s4 1983009808
        %v977 = vunpack.c.0.s8 %v976
        %v978 = vlaneseq
        %v979 = vshrl.u32 %v978, 7
        %v980 = vsub.s32 %v977, %v979
        %v981 = vrot.slane %v974, %v980
        %v982 = vcombine.low %v957, %v965
        %v983 = vcombine.high %v957, %v965
        %v985 = vunpack.c.l.s4 1934713408
        %v986 = vunpack.c.0.s8 %v985
        %v987 = vlaneseq
        %v988 = vshrl.u32 %v987, 7
        %v989 = vsub.s32 %v986, %v988
        %v990 = vrot.slane %v982, %v989
        %v992 = vunpack.c.l.s4 1934713408
        %v993 = vunpack.c.0.s8 %v992
        %v994 = vlaneseq
        %v995 = vshrl.u32 %v994, 7
        %v996 = vsub.s32 %v993, %v995
        %v997 = vrot.slane %v983, %v996
        %v998 = vcombine.low %v973, %v981
        %v999 = vcombine.high %v973, %v981
        %v1001 = vunpack.c.l.s4 1934713408
        %v1002 = vunpack.c.0.s8 %v1001
        %v1003 = vlaneseq
        %v1004 = vshrl.u32 %v1003, 7
        %v1005 = vsub.s32 %v1002, %v1004
        %v1006 = vrot.slane %v998, %v1005
        %v1008 = vunpack.c.l.s4 1934713408
        %v1009 = vunpack.c.0.s8 %v1008
        %v1010 = vlaneseq
        %v1011 = vshrl.u32 %v1010, 7
        %v1012 = vsub.s32 %v1009, %v1011
        %v1013 = vrot.slane %v999, %v1012
        %v1014 = vcombine.low %v990, %v1006
        %v1015 = vcombine.high %v990, %v1006
        %v1016 = vcombine.low %v997, %v1013
        %v1017 = vcombine.high %v997, %v1013
        %v1018 = vpack.c.bf16 %v1014, %v946
        %v1019 = vpack.c.bf16 %v1015, %v947
        %v1020 = vpack.c.bf16 %v1016, %v948
        %v1021 = vpack.c.bf16 %v1017, %v949
        %v1026 = vunpack.c.l.b16 %v1018
        %v1027 = vunpack.c.h.b16 %v1018
        %v1028 = vunpack.c.l.b16 %v1019
        %v1029 = vunpack.c.h.b16 %v1019
        %v1030 = vunpack.c.l.b16 %v1020
        %v1031 = vunpack.c.h.b16 %v1020
        %v1032 = vunpack.c.l.b16 %v1021
        %v1033 = vunpack.c.h.b16 %v1021
        %v1034 = vpack.c.b16 %v1026, %v1026
        %v1035 = vpack.c.b16 %v1027, %v1027
        %v1036 = vpack.c.b16 %v1028, %v1028
        %v1037 = vpack.c.b16 %v1029, %v1029
        %v1038 = vpack.c.b16 %v1030, %v1030
        %v1039 = vpack.c.b16 %v1031, %v1031
        %v1040 = vpack.c.b16 %v1032, %v1032
        %v1041 = vpack.c.b16 %v1033, %v1033
        %vm1050 = vcmask 257024
        %1051 = vst.msk [vmem:[%s544] sm:$0xf] %vm1050, %v1034
        %1052 = vst.msk [vmem:[%s544 + $0x4] sm:$0xf] %vm1050, %v1035
        %1053 = vst.msk [vmem:[%s544 + $0x8] sm:$0xf] %vm1050, %v1036
        %1054 = vst.msk [vmem:[%s544 + $0xc] sm:$0xf] %vm1050, %v1037
        %1055 = vst.msk [vmem:[%s544 + $0x10] sm:$0xf] %vm1050, %v1038
        %1056 = vst.msk [vmem:[%s544 + $0x14] sm:$0xf] %vm1050, %v1039
        %1057 = vst.msk [vmem:[%s544 + $0x18] sm:$0xf] %vm1050, %v1040
        %1058 = vst.msk [vmem:[%s544 + $0x1c] sm:$0xf] %vm1050, %v1041
        %v1059 = vld [vmem:[#allocation8] sm:$0xf]
        %v1060 = vld [vmem:[#allocation8 + $0x4] sm:$0xf]
        %v1061 = vld [vmem:[#allocation8 + $0x8] sm:$0xf]
        %v1062 = vld [vmem:[#allocation8 + $0xc] sm:$0xf]
        %v1063 = vld [vmem:[#allocation8 + $0x10] sm:$0xf]
        %v1064 = vld [vmem:[#allocation8 + $0x14] sm:$0xf]
        %v1065 = vld [vmem:[#allocation8 + $0x18] sm:$0xf]
        %v1066 = vld [vmem:[#allocation8 + $0x1c] sm:$0xf]
        %v1067 = vld [vmem:[#allocation8 + $0x20] sm:$0xf]
        %v1068 = vld [vmem:[#allocation8 + $0x24] sm:$0xf]
        %v1069 = vld [vmem:[#allocation8 + $0x28] sm:$0xf]
        %v1070 = vld [vmem:[#allocation8 + $0x2c] sm:$0xf]
        %v1071 = vld [vmem:[#allocation8 + $0x30] sm:$0xf]
        %v1072 = vld [vmem:[#allocation8 + $0x34] sm:$0xf]
        %v1073 = vld [vmem:[#allocation8 + $0x38] sm:$0xf]
        %v1074 = vld [vmem:[#allocation8 + $0x3c] sm:$0xf]
        %v1075 = vld [vmem:[%s8] sm:$0x1]
        %v1077 = vlaneseq
        %v1078 = vshrl.u32 %v1077, 7
        %v1079 = vsub.s32 0, %v1078
        %v1080 = vrot.slane %v1075, %v1079
        %v1098 = vunpack.c.l.b16 %v1059
        %v1099 = vunpack.c.l.b16 %v1060
        %v1100 = vunpack.c.l.b16 %v1061
        %v1101 = vunpack.c.l.b16 %v1062
        %v1102 = vunpack.c.l.b16 %v1063
        %v1103 = vunpack.c.l.b16 %v1064
        %v1104 = vunpack.c.l.b16 %v1065
        %v1105 = vunpack.c.l.b16 %v1066
        %v1106 = vunpack.c.l.b16 %v1067
        %v1107 = vunpack.c.l.b16 %v1068
        %v1108 = vunpack.c.l.b16 %v1069
        %v1109 = vunpack.c.l.b16 %v1070
        %v1110 = vunpack.c.l.b16 %v1071
        %v1111 = vunpack.c.l.b16 %v1072
        %v1112 = vunpack.c.l.b16 %v1073
        %v1113 = vunpack.c.l.b16 %v1074
        %v1114 = vpack.c.b16 %v1099, %v1098
        %v1115 = vpack.c.b16 %v1101, %v1100
        %v1116 = vpack.c.b16 %v1103, %v1102
        %v1117 = vpack.c.b16 %v1105, %v1104
        %v1118 = vpack.c.b16 %v1107, %v1106
        %v1119 = vpack.c.b16 %v1109, %v1108
        %v1120 = vpack.c.b16 %v1111, %v1110
        %v1121 = vpack.c.b16 %v1113, %v1112
        %1130 = vmatprep.subr.bf16.mxu0 0
        %1131 = vmatpush1.bf16.msra.mxu0 %v1114
        %1132 = vmatprep.subr.bf16.mxu0 0
        %1133 = vmatpush1.bf16.msra.mxu0 %v1115
        %1134 = vmatprep.subr.bf16.mxu0 0
        %1135 = vmatpush1.bf16.msra.mxu0 %v1116
        %1136 = vmatprep.subr.bf16.mxu0 0
        %1137 = vmatpush1.bf16.msra.mxu0 %v1117
        %1138 = vmatprep.subr.bf16.mxu0 0
        %1139 = vmatpush1.bf16.msra.mxu0 %v1118
        %1140 = vmatprep.subr.bf16.mxu0 0
        %1141 = vmatpush1.bf16.msra.mxu0 %v1119
        %1142 = vmatprep.subr.bf16.mxu0 0
        %1143 = vmatpush1.bf16.msra.mxu0 %v1120
        %1144 = vmatprep.subr.bf16.mxu0 0
        %1145 = vmatpush1.bf16.msra.mxu0 %v1121
        %1146 = vmatprep.subr.bf16.mxu0 0
        %1147 = vmatpush1.bf16.msra.mxu0 0
        %1148 = vmatprep.subr.bf16.mxu0 0
        %1149 = vmatpush1.bf16.msra.mxu0 0
        %1150 = vmatprep.subr.bf16.mxu0 0
        %1151 = vmatpush1.bf16.msra.mxu0 0
        %1152 = vmatprep.subr.bf16.mxu0 0
        %1153 = vmatpush1.bf16.msra.mxu0 0
        %1154 = vmatprep.subr.bf16.mxu0 0
        %1155 = vmatpush1.bf16.msra.mxu0 0
        %1156 = vmatprep.subr.bf16.mxu0 0
        %1157 = vmatpush1.bf16.msra.mxu0 0
        %1158 = vmatprep.subr.bf16.mxu0 0
        %1159 = vmatpush1.bf16.msra.mxu0 0
        %1160 = vmatprep.subr.bf16.mxu0 0
        %1161 = vmatpush1.bf16.msra.mxu0 0
        %1162 = vmatprep.mubr.bf16.mxu0 0
        %1163 = vmatmul.mubr.bf16.gmra.mrb[0].mxu0 %v612
        %v1164 = vpop.f32.mrb[0].mxu0
        %v1165 = vadd.f32 %v1080, %v1164
        %v1166 = vpop.f32.mrb[0].mxu0
        %v1167 = vpop.f32.mrb[0].mxu0
        %v1168 = vadd.f32 %v1080, %v1167
        %v1169 = vpop.f32.mrb[0].mxu0
        %1170 = vdwg.mxu0
        %1173 = vrot.lane.b32.xlu0 %v1165, 96
        %v1174 = vpop.permute.xlu0 %1173
        %1175 = vrot.lane.b32.xlu0 %v1168, 96
        %v1176 = vpop.permute.xlu0 %1175
        %1179 = vrot.lane.b32.xlu0 %v1165, 64
        %v1180 = vpop.permute.xlu0 %1179
        %1181 = vrot.lane.b32.xlu0 %v1168, 64
        %v1182 = vpop.permute.xlu0 %1181
        %1185 = vrot.lane.b32.xlu0 %v1165, 32
        %v1186 = vpop.permute.xlu0 %1185
        %1187 = vrot.lane.b32.xlu0 %v1168, 32
        %v1188 = vpop.permute.xlu0 %1187
        %v1191 = vcombine.low %v1165, %v1180
        %v1192 = vcombine.high %v1165, %v1180
        %v1194 = vunpack.c.l.s4 1983009808
        %v1195 = vunpack.c.0.s8 %v1194
        %v1196 = vlaneseq
        %v1197 = vshrl.u32 %v1196, 7
        %v1198 = vsub.s32 %v1195, %v1197
        %v1199 = vrot.slane %v1191, %v1198
        %v1201 = vunpack.c.l.s4 1983009808
        %v1202 = vunpack.c.0.s8 %v1201
        %v1203 = vlaneseq
        %v1204 = vshrl.u32 %v1203, 7
        %v1205 = vsub.s32 %v1202, %v1204
        %v1206 = vrot.slane %v1192, %v1205
        %v1207 = vcombine.low %v1174, %v1186
        %v1208 = vcombine.high %v1174, %v1186
        %v1210 = vunpack.c.l.s4 1983009808
        %v1211 = vunpack.c.0.s8 %v1210
        %v1212 = vlaneseq
        %v1213 = vshrl.u32 %v1212, 7
        %v1214 = vsub.s32 %v1211, %v1213
        %v1215 = vrot.slane %v1207, %v1214
        %v1217 = vunpack.c.l.s4 1983009808
        %v1218 = vunpack.c.0.s8 %v1217
        %v1219 = vlaneseq
        %v1220 = vshrl.u32 %v1219, 7
        %v1221 = vsub.s32 %v1218, %v1220
        %v1222 = vrot.slane %v1208, %v1221
        %v1223 = vcombine.low %v1199, %v1215
        %v1224 = vcombine.high %v1199, %v1215
        %v1226 = vunpack.c.l.s4 1934713408
        %v1227 = vunpack.c.0.s8 %v1226
        %v1228 = vlaneseq
        %v1229 = vshrl.u32 %v1228, 7
        %v1230 = vsub.s32 %v1227, %v1229
        %v1231 = vrot.slane %v1223, %v1230
        %v1233 = vunpack.c.l.s4 1934713408
        %v1234 = vunpack.c.0.s8 %v1233
        %v1235 = vlaneseq
        %v1236 = vshrl.u32 %v1235, 7
        %v1237 = vsub.s32 %v1234, %v1236
        %v1238 = vrot.slane %v1224, %v1237
        %v1239 = vcombine.low %v1206, %v1222
        %v1240 = vcombine.high %v1206, %v1222
        %v1242 = vunpack.c.l.s4 1934713408
        %v1243 = vunpack.c.0.s8 %v1242
        %v1244 = vlaneseq
        %v1245 = vshrl.u32 %v1244, 7
        %v1246 = vsub.s32 %v1243, %v1245
        %v1247 = vrot.slane %v1239, %v1246
        %v1249 = vunpack.c.l.s4 1934713408
        %v1250 = vunpack.c.0.s8 %v1249
        %v1251 = vlaneseq
        %v1252 = vshrl.u32 %v1251, 7
        %v1253 = vsub.s32 %v1250, %v1252
        %v1254 = vrot.slane %v1240, %v1253
        %v1255 = vcombine.high %v1231, 0.0
        %v1256 = vcombine.high %v1238, 0.0
        %v1257 = vcombine.high %v1247, 0.0
        %v1258 = vcombine.high %v1254, 0.0
        %v1259 = vcombine.low %v1168, %v1182
        %v1260 = vcombine.high %v1168, %v1182
        %v1262 = vunpack.c.l.s4 1983009808
        %v1263 = vunpack.c.0.s8 %v1262
        %v1264 = vlaneseq
        %v1265 = vshrl.u32 %v1264, 7
        %v1266 = vsub.s32 %v1263, %v1265
        %v1267 = vrot.slane %v1259, %v1266
        %v1269 = vunpack.c.l.s4 1983009808
        %v1270 = vunpack.c.0.s8 %v1269
        %v1271 = vlaneseq
        %v1272 = vshrl.u32 %v1271, 7
        %v1273 = vsub.s32 %v1270, %v1272
        %v1274 = vrot.slane %v1260, %v1273
        %v1275 = vcombine.low %v1176, %v1188
        %v1276 = vcombine.high %v1176, %v1188
        %v1278 = vunpack.c.l.s4 1983009808
        %v1279 = vunpack.c.0.s8 %v1278
        %v1280 = vlaneseq
        %v1281 = vshrl.u32 %v1280, 7
        %v1282 = vsub.s32 %v1279, %v1281
        %v1283 = vrot.slane %v1275, %v1282
        %v1285 = vunpack.c.l.s4 1983009808
        %v1286 = vunpack.c.0.s8 %v1285
        %v1287 = vlaneseq
        %v1288 = vshrl.u32 %v1287, 7
        %v1289 = vsub.s32 %v1286, %v1288
        %v1290 = vrot.slane %v1276, %v1289
        %v1291 = vcombine.low %v1267, %v1283
        %v1292 = vcombine.high %v1267, %v1283
        %v1294 = vunpack.c.l.s4 1934713408
        %v1295 = vunpack.c.0.s8 %v1294
        %v1296 = vlaneseq
        %v1297 = vshrl.u32 %v1296, 7
        %v1298 = vsub.s32 %v1295, %v1297
        %v1299 = vrot.slane %v1291, %v1298
        %v1301 = vunpack.c.l.s4 1934713408
        %v1302 = vunpack.c.0.s8 %v1301
        %v1303 = vlaneseq
        %v1304 = vshrl.u32 %v1303, 7
        %v1305 = vsub.s32 %v1302, %v1304
        %v1306 = vrot.slane %v1292, %v1305
        %v1307 = vcombine.low %v1274, %v1290
        %v1308 = vcombine.high %v1274, %v1290
        %v1310 = vunpack.c.l.s4 1934713408
        %v1311 = vunpack.c.0.s8 %v1310
        %v1312 = vlaneseq
        %v1313 = vshrl.u32 %v1312, 7
        %v1314 = vsub.s32 %v1311, %v1313
        %v1315 = vrot.slane %v1307, %v1314
        %v1317 = vunpack.c.l.s4 1934713408
        %v1318 = vunpack.c.0.s8 %v1317
        %v1319 = vlaneseq
        %v1320 = vshrl.u32 %v1319, 7
        %v1321 = vsub.s32 %v1318, %v1320
        %v1322 = vrot.slane %v1308, %v1321
        %v1323 = vcombine.high %v1299, 0.0
        %v1324 = vcombine.high %v1306, 0.0
        %v1325 = vcombine.high %v1315, 0.0
        %v1326 = vcombine.high %v1322, 0.0
        %v1327 = vcombine.low %v1231, %v1238
        %v1329 = vunpack.c.l.s4 1983009808
        %v1330 = vunpack.c.0.s8 %v1329
        %v1331 = vlaneseq
        %v1332 = vshrl.u32 %v1331, 7
        %v1333 = vsub.s32 %v1330, %v1332
        %v1334 = vrot.slane %v1327, %v1333
        %v1335 = vcombine.low %v1255, %v1256
        %v1337 = vunpack.c.l.s4 1983009808
        %v1338 = vunpack.c.0.s8 %v1337
        %v1339 = vlaneseq
        %v1340 = vshrl.u32 %v1339, 7
        %v1341 = vsub.s32 %v1338, %v1340
        %v1342 = vrot.slane %v1335, %v1341
        %v1343 = vcombine.low %v1247, %v1254
        %v1345 = vunpack.c.l.s4 1983009808
        %v1346 = vunpack.c.0.s8 %v1345
        %v1347 = vlaneseq
        %v1348 = vshrl.u32 %v1347, 7
        %v1349 = vsub.s32 %v1346, %v1348
        %v1350 = vrot.slane %v1343, %v1349
        %v1351 = vcombine.low %v1257, %v1258
        %v1353 = vunpack.c.l.s4 1983009808
        %v1354 = vunpack.c.0.s8 %v1353
        %v1355 = vlaneseq
        %v1356 = vshrl.u32 %v1355, 7
        %v1357 = vsub.s32 %v1354, %v1356
        %v1358 = vrot.slane %v1351, %v1357
        %v1359 = vcombine.low %v1334, %v1342
        %v1360 = vcombine.high %v1334, %v1342
        %v1362 = vunpack.c.l.s4 1934713408
        %v1363 = vunpack.c.0.s8 %v1362
        %v1364 = vlaneseq
        %v1365 = vshrl.u32 %v1364, 7
        %v1366 = vsub.s32 %v1363, %v1365
        %v1367 = vrot.slane %v1359, %v1366
        %v1369 = vunpack.c.l.s4 1934713408
        %v1370 = vunpack.c.0.s8 %v1369
        %v1371 = vlaneseq
        %v1372 = vshrl.u32 %v1371, 7
        %v1373 = vsub.s32 %v1370, %v1372
        %v1374 = vrot.slane %v1360, %v1373
        %v1375 = vcombine.low %v1350, %v1358
        %v1376 = vcombine.high %v1350, %v1358
        %v1378 = vunpack.c.l.s4 1934713408
        %v1379 = vunpack.c.0.s8 %v1378
        %v1380 = vlaneseq
        %v1381 = vshrl.u32 %v1380, 7
        %v1382 = vsub.s32 %v1379, %v1381
        %v1383 = vrot.slane %v1375, %v1382
        %v1385 = vunpack.c.l.s4 1934713408
        %v1386 = vunpack.c.0.s8 %v1385
        %v1387 = vlaneseq
        %v1388 = vshrl.u32 %v1387, 7
        %v1389 = vsub.s32 %v1386, %v1388
        %v1390 = vrot.slane %v1376, %v1389
        %v1391 = vcombine.low %v1367, %v1383
        %v1392 = vcombine.high %v1367, %v1383
        %v1393 = vcombine.low %v1374, %v1390
        %v1394 = vcombine.high %v1374, %v1390
        %v1395 = vcombine.low %v1299, %v1306
        %v1397 = vunpack.c.l.s4 1983009808
        %v1398 = vunpack.c.0.s8 %v1397
        %v1399 = vlaneseq
        %v1400 = vshrl.u32 %v1399, 7
        %v1401 = vsub.s32 %v1398, %v1400
        %v1402 = vrot.slane %v1395, %v1401
        %v1403 = vcombine.low %v1323, %v1324
        %v1405 = vunpack.c.l.s4 1983009808
        %v1406 = vunpack.c.0.s8 %v1405
        %v1407 = vlaneseq
        %v1408 = vshrl.u32 %v1407, 7
        %v1409 = vsub.s32 %v1406, %v1408
        %v1410 = vrot.slane %v1403, %v1409
        %v1411 = vcombine.low %v1315, %v1322
        %v1413 = vunpack.c.l.s4 1983009808
        %v1414 = vunpack.c.0.s8 %v1413
        %v1415 = vlaneseq
        %v1416 = vshrl.u32 %v1415, 7
        %v1417 = vsub.s32 %v1414, %v1416
        %v1418 = vrot.slane %v1411, %v1417
        %v1419 = vcombine.low %v1325, %v1326
        %v1421 = vunpack.c.l.s4 1983009808
        %v1422 = vunpack.c.0.s8 %v1421
        %v1423 = vlaneseq
        %v1424 = vshrl.u32 %v1423, 7
        %v1425 = vsub.s32 %v1422, %v1424
        %v1426 = vrot.slane %v1419, %v1425
        %v1427 = vcombine.low %v1402, %v1410
        %v1428 = vcombine.high %v1402, %v1410
        %v1430 = vunpack.c.l.s4 1934713408
        %v1431 = vunpack.c.0.s8 %v1430
        %v1432 = vlaneseq
        %v1433 = vshrl.u32 %v1432, 7
        %v1434 = vsub.s32 %v1431, %v1433
        %v1435 = vrot.slane %v1427, %v1434
        %v1437 = vunpack.c.l.s4 1934713408
        %v1438 = vunpack.c.0.s8 %v1437
        %v1439 = vlaneseq
        %v1440 = vshrl.u32 %v1439, 7
        %v1441 = vsub.s32 %v1438, %v1440
        %v1442 = vrot.slane %v1428, %v1441
        %v1443 = vcombine.low %v1418, %v1426
        %v1444 = vcombine.high %v1418, %v1426
        %v1446 = vunpack.c.l.s4 1934713408
        %v1447 = vunpack.c.0.s8 %v1446
        %v1448 = vlaneseq
        %v1449 = vshrl.u32 %v1448, 7
        %v1450 = vsub.s32 %v1447, %v1449
        %v1451 = vrot.slane %v1443, %v1450
        %v1453 = vunpack.c.l.s4 1934713408
        %v1454 = vunpack.c.0.s8 %v1453
        %v1455 = vlaneseq
        %v1456 = vshrl.u32 %v1455, 7
        %v1457 = vsub.s32 %v1454, %v1456
        %v1458 = vrot.slane %v1444, %v1457
        %v1459 = vcombine.low %v1435, %v1451
        %v1460 = vcombine.high %v1435, %v1451
        %v1461 = vcombine.low %v1442, %v1458
        %v1462 = vcombine.high %v1442, %v1458
        %v1463 = vpack.c.bf16 %v1459, %v1391
        %v1464 = vpack.c.bf16 %v1460, %v1392
        %v1465 = vpack.c.bf16 %v1461, %v1393
        %v1466 = vpack.c.bf16 %v1462, %v1394
        %v1471 = vunpack.c.l.b16 %v1463
        %v1472 = vunpack.c.h.b16 %v1463
        %v1473 = vunpack.c.l.b16 %v1464
        %v1474 = vunpack.c.h.b16 %v1464
        %v1475 = vunpack.c.l.b16 %v1465
        %v1476 = vunpack.c.h.b16 %v1465
        %v1477 = vunpack.c.l.b16 %v1466
        %v1478 = vunpack.c.h.b16 %v1466
        %v1479 = vpack.c.b16 %v1471, %v1471
        %v1480 = vpack.c.b16 %v1472, %v1472
        %v1481 = vpack.c.b16 %v1473, %v1473
        %v1482 = vpack.c.b16 %v1474, %v1474
        %v1483 = vpack.c.b16 %v1475, %v1475
        %v1484 = vpack.c.b16 %v1476, %v1476
        %v1485 = vpack.c.b16 %v1477, %v1477
        %v1486 = vpack.c.b16 %v1478, %v1478
        %1495 = vst.msk [vmem:[%s551] sm:$0xf] %vm1050, %v1479
        %1496 = vst.msk [vmem:[%s551 + $0x4] sm:$0xf] %vm1050, %v1480
        %1497 = vst.msk [vmem:[%s551 + $0x8] sm:$0xf] %vm1050, %v1481
        %1498 = vst.msk [vmem:[%s551 + $0xc] sm:$0xf] %vm1050, %v1482
        %1499 = vst.msk [vmem:[%s551 + $0x10] sm:$0xf] %vm1050, %v1483
        %1500 = vst.msk [vmem:[%s551 + $0x14] sm:$0xf] %vm1050, %v1484
        %1501 = vst.msk [vmem:[%s551 + $0x18] sm:$0xf] %vm1050, %v1485
        %1502 = vst.msk [vmem:[%s551 + $0x1c] sm:$0xf] %vm1050, %v1486
        %v1503 = vld [vmem:[#allocation10] sm:$0xf]
        %v1504 = vld [vmem:[#allocation10 + $0x4] sm:$0xf]
        %v1505 = vld [vmem:[#allocation10 + $0x8] sm:$0xf]
        %v1506 = vld [vmem:[#allocation10 + $0xc] sm:$0xf]
        %v1507 = vld [vmem:[#allocation10 + $0x10] sm:$0xf]
        %v1508 = vld [vmem:[#allocation10 + $0x14] sm:$0xf]
        %v1509 = vld [vmem:[#allocation10 + $0x18] sm:$0xf]
        %v1510 = vld [vmem:[#allocation10 + $0x1c] sm:$0xf]
        %v1511 = vld [vmem:[#allocation10 + $0x20] sm:$0xf]
        %v1512 = vld [vmem:[#allocation10 + $0x24] sm:$0xf]
        %v1513 = vld [vmem:[#allocation10 + $0x28] sm:$0xf]
        %v1514 = vld [vmem:[#allocation10 + $0x2c] sm:$0xf]
        %v1515 = vld [vmem:[#allocation10 + $0x30] sm:$0xf]
        %v1516 = vld [vmem:[#allocation10 + $0x34] sm:$0xf]
        %v1517 = vld [vmem:[#allocation10 + $0x38] sm:$0xf]
        %v1518 = vld [vmem:[#allocation10 + $0x3c] sm:$0xf]
        %v1519 = vld [vmem:[%s9] sm:$0x1]
        %v1521 = vlaneseq
        %v1522 = vshrl.u32 %v1521, 7
        %v1523 = vsub.s32 0, %v1522
        %v1524 = vrot.slane %v1519, %v1523
        %v1542 = vunpack.c.l.b16 %v1503
        %v1543 = vunpack.c.l.b16 %v1504
        %v1544 = vunpack.c.l.b16 %v1505
        %v1545 = vunpack.c.l.b16 %v1506
        %v1546 = vunpack.c.l.b16 %v1507
        %v1547 = vunpack.c.l.b16 %v1508
        %v1548 = vunpack.c.l.b16 %v1509
        %v1549 = vunpack.c.l.b16 %v1510
        %v1550 = vunpack.c.l.b16 %v1511
        %v1551 = vunpack.c.l.b16 %v1512
        %v1552 = vunpack.c.l.b16 %v1513
        %v1553 = vunpack.c.l.b16 %v1514
        %v1554 = vunpack.c.l.b16 %v1515
        %v1555 = vunpack.c.l.b16 %v1516
        %v1556 = vunpack.c.l.b16 %v1517
        %v1557 = vunpack.c.l.b16 %v1518
        %v1558 = vpack.c.b16 %v1543, %v1542
        %v1559 = vpack.c.b16 %v1545, %v1544
        %v1560 = vpack.c.b16 %v1547, %v1546
        %v1561 = vpack.c.b16 %v1549, %v1548
        %v1562 = vpack.c.b16 %v1551, %v1550
        %v1563 = vpack.c.b16 %v1553, %v1552
        %v1564 = vpack.c.b16 %v1555, %v1554
        %v1565 = vpack.c.b16 %v1557, %v1556
        %1574 = vmatprep.subr.bf16.mxu0 0
        %1575 = vmatpush1.bf16.msra.mxu0 %v1558
        %1576 = vmatprep.subr.bf16.mxu0 0
        %1577 = vmatpush1.bf16.msra.mxu0 %v1559
        %1578 = vmatprep.subr.bf16.mxu0 0
        %1579 = vmatpush1.bf16.msra.mxu0 %v1560
        %1580 = vmatprep.subr.bf16.mxu0 0
        %1581 = vmatpush1.bf16.msra.mxu0 %v1561
        %1582 = vmatprep.subr.bf16.mxu0 0
        %1583 = vmatpush1.bf16.msra.mxu0 %v1562
        %1584 = vmatprep.subr.bf16.mxu0 0
        %1585 = vmatpush1.bf16.msra.mxu0 %v1563
        %1586 = vmatprep.subr.bf16.mxu0 0
        %1587 = vmatpush1.bf16.msra.mxu0 %v1564
        %1588 = vmatprep.subr.bf16.mxu0 0
        %1589 = vmatpush1.bf16.msra.mxu0 %v1565
        %1590 = vmatprep.subr.bf16.mxu0 0
        %1591 = vmatpush1.bf16.msra.mxu0 0
        %1592 = vmatprep.subr.bf16.mxu0 0
        %1593 = vmatpush1.bf16.msra.mxu0 0
        %1594 = vmatprep.subr.bf16.mxu0 0
        %1595 = vmatpush1.bf16.msra.mxu0 0
        %1596 = vmatprep.subr.bf16.mxu0 0
        %1597 = vmatpush1.bf16.msra.mxu0 0
        %1598 = vmatprep.subr.bf16.mxu0 0
        %1599 = vmatpush1.bf16.msra.mxu0 0
        %1600 = vmatprep.subr.bf16.mxu0 0
        %1601 = vmatpush1.bf16.msra.mxu0 0
        %1602 = vmatprep.subr.bf16.mxu0 0
        %1603 = vmatpush1.bf16.msra.mxu0 0
        %1604 = vmatprep.subr.bf16.mxu0 0
        %1605 = vmatpush1.bf16.msra.mxu0 0
        %1606 = vmatprep.mubr.bf16.mxu0 0
        %1607 = vmatmul.mubr.bf16.gmra.mrb[0].mxu0 %v613
        %v1608 = vpop.f32.mrb[0].mxu0
        %v1609 = vadd.f32 %v1524, %v1608
        %v1610 = vpop.f32.mrb[0].mxu0
        %v1611 = vpop.f32.mrb[0].mxu0
        %v1612 = vadd.f32 %v1524, %v1611
        %v1613 = vpop.f32.mrb[0].mxu0
        %1614 = vdwg.mxu0
        %1617 = vrot.lane.b32.xlu0 %v1609, 96
        %v1618 = vpop.permute.xlu0 %1617
        %1619 = vrot.lane.b32.xlu0 %v1612, 96
        %v1620 = vpop.permute.xlu0 %1619
        %1623 = vrot.lane.b32.xlu0 %v1609, 64
        %v1624 = vpop.permute.xlu0 %1623
        %1625 = vrot.lane.b32.xlu0 %v1612, 64
        %v1626 = vpop.permute.xlu0 %1625
        %1629 = vrot.lane.b32.xlu0 %v1609, 32
        %v1630 = vpop.permute.xlu0 %1629
        %1631 = vrot.lane.b32.xlu0 %v1612, 32
        %v1632 = vpop.permute.xlu0 %1631
        %v1635 = vcombine.low %v1609, %v1624
        %v1636 = vcombine.high %v1609, %v1624
        %v1638 = vunpack.c.l.s4 1983009808
        %v1639 = vunpack.c.0.s8 %v1638
        %v1640 = vlaneseq
        %v1641 = vshrl.u32 %v1640, 7
        %v1642 = vsub.s32 %v1639, %v1641
        %v1643 = vrot.slane %v1635, %v1642
        %v1645 = vunpack.c.l.s4 1983009808
        %v1646 = vunpack.c.0.s8 %v1645
        %v1647 = vlaneseq
        %v1648 = vshrl.u32 %v1647, 7
        %v1649 = vsub.s32 %v1646, %v1648
        %v1650 = vrot.slane %v1636, %v1649
        %v1651 = vcombine.low %v1618, %v1630
        %v1652 = vcombine.high %v1618, %v1630
        %v1654 = vunpack.c.l.s4 1983009808
        %v1655 = vunpack.c.0.s8 %v1654
        %v1656 = vlaneseq
        %v1657 = vshrl.u32 %v1656, 7
        %v1658 = vsub.s32 %v1655, %v1657
        %v1659 = vrot.slane %v1651, %v1658
        %v1661 = vunpack.c.l.s4 1983009808
        %v1662 = vunpack.c.0.s8 %v1661
        %v1663 = vlaneseq
        %v1664 = vshrl.u32 %v1663, 7
        %v1665 = vsub.s32 %v1662, %v1664
        %v1666 = vrot.slane %v1652, %v1665
        %v1667 = vcombine.low %v1643, %v1659
        %v1668 = vcombine.high %v1643, %v1659
        %v1670 = vunpack.c.l.s4 1934713408
        %v1671 = vunpack.c.0.s8 %v1670
        %v1672 = vlaneseq
        %v1673 = vshrl.u32 %v1672, 7
        %v1674 = vsub.s32 %v1671, %v1673
        %v1675 = vrot.slane %v1667, %v1674
        %v1677 = vunpack.c.l.s4 1934713408
        %v1678 = vunpack.c.0.s8 %v1677
        %v1679 = vlaneseq
        %v1680 = vshrl.u32 %v1679, 7
        %v1681 = vsub.s32 %v1678, %v1680
        %v1682 = vrot.slane %v1668, %v1681
        %v1683 = vcombine.low %v1650, %v1666
        %v1684 = vcombine.high %v1650, %v1666
        %v1686 = vunpack.c.l.s4 1934713408
        %v1687 = vunpack.c.0.s8 %v1686
        %v1688 = vlaneseq
        %v1689 = vshrl.u32 %v1688, 7
        %v1690 = vsub.s32 %v1687, %v1689
        %v1691 = vrot.slane %v1683, %v1690
        %v1693 = vunpack.c.l.s4 1934713408
        %v1694 = vunpack.c.0.s8 %v1693
        %v1695 = vlaneseq
        %v1696 = vshrl.u32 %v1695, 7
        %v1697 = vsub.s32 %v1694, %v1696
        %v1698 = vrot.slane %v1684, %v1697
        %v1699 = vcombine.high %v1675, 0.0
        %v1700 = vcombine.high %v1682, 0.0
        %v1701 = vcombine.high %v1691, 0.0
        %v1702 = vcombine.high %v1698, 0.0
        %v1703 = vcombine.low %v1612, %v1626
        %v1704 = vcombine.high %v1612, %v1626
        %v1706 = vunpack.c.l.s4 1983009808
        %v1707 = vunpack.c.0.s8 %v1706
        %v1708 = vlaneseq
        %v1709 = vshrl.u32 %v1708, 7
        %v1710 = vsub.s32 %v1707, %v1709
        %v1711 = vrot.slane %v1703, %v1710
        %v1713 = vunpack.c.l.s4 1983009808
        %v1714 = vunpack.c.0.s8 %v1713
        %v1715 = vlaneseq
        %v1716 = vshrl.u32 %v1715, 7
        %v1717 = vsub.s32 %v1714, %v1716
        %v1718 = vrot.slane %v1704, %v1717
        %v1719 = vcombine.low %v1620, %v1632
        %v1720 = vcombine.high %v1620, %v1632
        %v1722 = vunpack.c.l.s4 1983009808
        %v1723 = vunpack.c.0.s8 %v1722
        %v1724 = vlaneseq
        %v1725 = vshrl.u32 %v1724, 7
        %v1726 = vsub.s32 %v1723, %v1725
        %v1727 = vrot.slane %v1719, %v1726
        %v1729 = vunpack.c.l.s4 1983009808
        %v1730 = vunpack.c.0.s8 %v1729
        %v1731 = vlaneseq
        %v1732 = vshrl.u32 %v1731, 7
        %v1733 = vsub.s32 %v1730, %v1732
        %v1734 = vrot.slane %v1720, %v1733
        %v1735 = vcombine.low %v1711, %v1727
        %v1736 = vcombine.high %v1711, %v1727
        %v1738 = vunpack.c.l.s4 1934713408
        %v1739 = vunpack.c.0.s8 %v1738
        %v1740 = vlaneseq
        %v1741 = vshrl.u32 %v1740, 7
        %v1742 = vsub.s32 %v1739, %v1741
        %v1743 = vrot.slane %v1735, %v1742
        %v1745 = vunpack.c.l.s4 1934713408
        %v1746 = vunpack.c.0.s8 %v1745
        %v1747 = vlaneseq
        %v1748 = vshrl.u32 %v1747, 7
        %v1749 = vsub.s32 %v1746, %v1748
        %v1750 = vrot.slane %v1736, %v1749
        %v1751 = vcombine.low %v1718, %v1734
        %v1752 = vcombine.high %v1718, %v1734
        %v1754 = vunpack.c.l.s4 1934713408
        %v1755 = vunpack.c.0.s8 %v1754
        %v1756 = vlaneseq
        %v1757 = vshrl.u32 %v1756, 7
        %v1758 = vsub.s32 %v1755, %v1757
        %v1759 = vrot.slane %v1751, %v1758
        %v1761 = vunpack.c.l.s4 1934713408
        %v1762 = vunpack.c.0.s8 %v1761
        %v1763 = vlaneseq
        %v1764 = vshrl.u32 %v1763, 7
        %v1765 = vsub.s32 %v1762, %v1764
        %v1766 = vrot.slane %v1752, %v1765
        %v1767 = vcombine.high %v1743, 0.0
        %v1768 = vcombine.high %v1750, 0.0
        %v1769 = vcombine.high %v1759, 0.0
        %v1770 = vcombine.high %v1766, 0.0
        %v1771 = vcombine.low %v1675, %v1682
        %v1773 = vunpack.c.l.s4 1983009808
        %v1774 = vunpack.c.0.s8 %v1773
        %v1775 = vlaneseq
        %v1776 = vshrl.u32 %v1775, 7
        %v1777 = vsub.s32 %v1774, %v1776
        %v1778 = vrot.slane %v1771, %v1777
        %v1779 = vcombine.low %v1699, %v1700
        %v1781 = vunpack.c.l.s4 1983009808
        %v1782 = vunpack.c.0.s8 %v1781
        %v1783 = vlaneseq
        %v1784 = vshrl.u32 %v1783, 7
        %v1785 = vsub.s32 %v1782, %v1784
        %v1786 = vrot.slane %v1779, %v1785
        %v1787 = vcombine.low %v1691, %v1698
        %v1789 = vunpack.c.l.s4 1983009808
        %v1790 = vunpack.c.0.s8 %v1789
        %v1791 = vlaneseq
        %v1792 = vshrl.u32 %v1791, 7
        %v1793 = vsub.s32 %v1790, %v1792
        %v1794 = vrot.slane %v1787, %v1793
        %v1795 = vcombine.low %v1701, %v1702
        %v1797 = vunpack.c.l.s4 1983009808
        %v1798 = vunpack.c.0.s8 %v1797
        %v1799 = vlaneseq
        %v1800 = vshrl.u32 %v1799, 7
        %v1801 = vsub.s32 %v1798, %v1800
        %v1802 = vrot.slane %v1795, %v1801
        %v1803 = vcombine.low %v1778, %v1786
        %v1804 = vcombine.high %v1778, %v1786
        %v1806 = vunpack.c.l.s4 1934713408
        %v1807 = vunpack.c.0.s8 %v1806
        %v1808 = vlaneseq
        %v1809 = vshrl.u32 %v1808, 7
        %v1810 = vsub.s32 %v1807, %v1809
        %v1811 = vrot.slane %v1803, %v1810
        %v1813 = vunpack.c.l.s4 1934713408
        %v1814 = vunpack.c.0.s8 %v1813
        %v1815 = vlaneseq
        %v1816 = vshrl.u32 %v1815, 7
        %v1817 = vsub.s32 %v1814, %v1816
        %v1818 = vrot.slane %v1804, %v1817
        %v1819 = vcombine.low %v1794, %v1802
        %v1820 = vcombine.high %v1794, %v1802
        %v1822 = vunpack.c.l.s4 1934713408
        %v1823 = vunpack.c.0.s8 %v1822
        %v1824 = vlaneseq
        %v1825 = vshrl.u32 %v1824, 7
        %v1826 = vsub.s32 %v1823, %v1825
        %v1827 = vrot.slane %v1819, %v1826
        %v1829 = vunpack.c.l.s4 1934713408
        %v1830 = vunpack.c.0.s8 %v1829
        %v1831 = vlaneseq
        %v1832 = vshrl.u32 %v1831, 7
        %v1833 = vsub.s32 %v1830, %v1832
        %v1834 = vrot.slane %v1820, %v1833
        %v1835 = vcombine.low %v1811, %v1827
        %v1836 = vcombine.high %v1811, %v1827
        %v1837 = vcombine.low %v1818, %v1834
        %v1838 = vcombine.high %v1818, %v1834
        %v1839 = vcombine.low %v1743, %v1750
        %v1841 = vunpack.c.l.s4 1983009808
        %v1842 = vunpack.c.0.s8 %v1841
        %v1843 = vlaneseq
        %v1844 = vshrl.u32 %v1843, 7
        %v1845 = vsub.s32 %v1842, %v1844
        %v1846 = vrot.slane %v1839, %v1845
        %v1847 = vcombine.low %v1767, %v1768
        %v1849 = vunpack.c.l.s4 1983009808
        %v1850 = vunpack.c.0.s8 %v1849
        %v1851 = vlaneseq
        %v1852 = vshrl.u32 %v1851, 7
        %v1853 = vsub.s32 %v1850, %v1852
        %v1854 = vrot.slane %v1847, %v1853
        %v1855 = vcombine.low %v1759, %v1766
        %v1857 = vunpack.c.l.s4 1983009808
        %v1858 = vunpack.c.0.s8 %v1857
        %v1859 = vlaneseq
        %v1860 = vshrl.u32 %v1859, 7
        %v1861 = vsub.s32 %v1858, %v1860
        %v1862 = vrot.slane %v1855, %v1861
        %v1863 = vcombine.low %v1769, %v1770
        %v1865 = vunpack.c.l.s4 1983009808
        %v1866 = vunpack.c.0.s8 %v1865
        %v1867 = vlaneseq
        %v1868 = vshrl.u32 %v1867, 7
        %v1869 = vsub.s32 %v1866, %v1868
        %v1870 = vrot.slane %v1863, %v1869
        %v1871 = vcombine.low %v1846, %v1854
        %v1872 = vcombine.high %v1846, %v1854
        %v1874 = vunpack.c.l.s4 1934713408
        %v1875 = vunpack.c.0.s8 %v1874
        %v1876 = vlaneseq
        %v1877 = vshrl.u32 %v1876, 7
        %v1878 = vsub.s32 %v1875, %v1877
        %v1879 = vrot.slane %v1871, %v1878
        %v1881 = vunpack.c.l.s4 1934713408
        %v1882 = vunpack.c.0.s8 %v1881
        %v1883 = vlaneseq
        %v1884 = vshrl.u32 %v1883, 7
        %v1885 = vsub.s32 %v1882, %v1884
        %v1886 = vrot.slane %v1872, %v1885
        %v1887 = vcombine.low %v1862, %v1870
        %v1888 = vcombine.high %v1862, %v1870
        %v1890 = vunpack.c.l.s4 1934713408
        %v1891 = vunpack.c.0.s8 %v1890
        %v1892 = vlaneseq
        %v1893 = vshrl.u32 %v1892, 7
        %v1894 = vsub.s32 %v1891, %v1893
        %v1895 = vrot.slane %v1887, %v1894
        %v1897 = vunpack.c.l.s4 1934713408
        %v1898 = vunpack.c.0.s8 %v1897
        %v1899 = vlaneseq
        %v1900 = vshrl.u32 %v1899, 7
        %v1901 = vsub.s32 %v1898, %v1900
        %v1902 = vrot.slane %v1888, %v1901
        %v1903 = vcombine.low %v1879, %v1895
        %v1904 = vcombine.high %v1879, %v1895
        %v1905 = vcombine.low %v1886, %v1902
        %v1906 = vcombine.high %v1886, %v1902
        %v1907 = vpack.c.bf16 %v1903, %v1835
        %v1908 = vpack.c.bf16 %v1904, %v1836
        %v1909 = vpack.c.bf16 %v1905, %v1837
        %v1910 = vpack.c.bf16 %v1906, %v1838
        %v1915 = vunpack.c.l.b16 %v1907
        %v1916 = vunpack.c.h.b16 %v1907
        %v1917 = vunpack.c.l.b16 %v1908
        %v1918 = vunpack.c.h.b16 %v1908
        %v1919 = vunpack.c.l.b16 %v1909
        %v1920 = vunpack.c.h.b16 %v1909
        %v1921 = vunpack.c.l.b16 %v1910
        %v1922 = vunpack.c.h.b16 %v1910
        %v1923 = vpack.c.b16 %v1915, %v1915
        %v1924 = vpack.c.b16 %v1916, %v1916
        %v1925 = vpack.c.b16 %v1917, %v1917
        %v1926 = vpack.c.b16 %v1918, %v1918
        %v1927 = vpack.c.b16 %v1919, %v1919
        %v1928 = vpack.c.b16 %v1920, %v1920
        %v1929 = vpack.c.b16 %v1921, %v1921
        %v1930 = vpack.c.b16 %v1922, %v1922
        %1939 = vst.msk [vmem:[%s558] sm:$0xf] %vm1050, %v1923
        %1940 = vst.msk [vmem:[%s558 + $0x4] sm:$0xf] %vm1050, %v1924
        %1941 = vst.msk [vmem:[%s558 + $0x8] sm:$0xf] %vm1050, %v1925
        %1942 = vst.msk [vmem:[%s558 + $0xc] sm:$0xf] %vm1050, %v1926
        %1943 = vst.msk [vmem:[%s558 + $0x10] sm:$0xf] %vm1050, %v1927
        %1944 = vst.msk [vmem:[%s558 + $0x14] sm:$0xf] %vm1050, %v1928
        %1945 = vst.msk [vmem:[%s558 + $0x18] sm:$0xf] %vm1050, %v1929
        %1946 = vst.msk [vmem:[%s558 + $0x1c] sm:$0xf] %vm1050, %v1930
        %s1947 = sand.u32 %s283, 1
        %s1948 = scalar_lea.sflag [#allocation4], %s1947
        %s1949 = sand.u32 %s283, 1
        %s1950 = smul.addr %s1949, 32
        %s1951 = scalar_lea.vmem [#allocation11], %s1950
        %s1952 = sand.u32 %s37, 1
        %s1953 = scalar_lea.sflag [#allocation13], %s1952
        %s1954 = sand.u32 %s311, 1
        %s1955 = smul.addr %s1954, 32
        %s1956 = scalar_lea.vmem [#allocation12], %s1955
        %s1957 = sand.u32 %s37, 1
        %s1958 = scalar_lea.sflag [#allocation13], %s1957
        %s1959 = sand.u32 %s339, 1
        %s1960 = smul.addr %s1959, 32
        %s1961 = scalar_lea.vmem [#allocation14], %s1960
        // Predicated region
        $region81: #{tpu_custom_call.1} parent=59 // pred_check
          %p1962 = pneg %p293
        $region82: #{tpu_custom_call.1} parent=59 // pred_check_branch
          %1964 = sbr.rel (%p1962) target = $region84
        $region83: #{tpu_custom_call.1} parent=59 // pred_region
          #allocation16 [shape = 'u32[6]{0}', space=smem, size = 0x18, scoped, tag = 'DMA stride descriptor']
          %s1965 = smul.u32 2, %s42
          %s1967 = ssub.s32 512, 512
          %1968 = vsyncadd %s1948, %s1967
          %s1969 = smul.addr %s41, 16
          %s1970 = sadd.s32 %s1965, %s1969
          %s1971 = smul.addr %s1970, 64
          %s1972 = scalar_lea.hbm %s10, %s1971
          %s1974 = sshll.u32 1, 14
          %s1975 = sxor.u32 4294967295, %s1974
          %s1978 = sshll.u32 7, 18
          %s1979 = sxor.u32 4294967295, %s1978
          %s1980 = sand.u32 0, %s1979
          %s1982 = sor.u32 %s1980, 0
          %s1984 = sshll.u32 3, 24
          %s1985 = sxor.u32 4294967295, %s1984
          %s1986 = sand.u32 %s1982, %s1985
          %s1988 = sor.u32 %s1986, 0
          %s1989 = sshll.u32 %s1951, 4
          %s1990 = int_to_ptr.vmem [resolvable:$true] %s1989
          %1996 = sst [smem:[#allocation16]] 128
          %s1997 = scalar_lea.smem [#allocation16], 1
          %1998 = sst [smem:[%s1997]] 256
          %s1999 = scalar_lea.smem [#allocation16], 2
          %2000 = sst [smem:[%s1999]] 2
          %s2001 = scalar_lea.smem [#allocation16], 3
          %2002 = sst [smem:[%s2001]] 64
          %s2003 = scalar_lea.smem [#allocation16], 4
          %2004 = sst [smem:[%s2003]] 64
          %s2005 = scalar_lea.smem [#allocation16], 5
          %2006 = sst [smem:[%s2005]] 4
          %2008 = dma.general %s1990, 512, %s1972, %s1948, [#allocation15], [#allocation16], %s1988, 0
        $region84: #{tpu_custom_call.1} parent=59 // pred_fallthru
          _
        // Predicated region
        $region85: #{tpu_custom_call.1} parent=59 // pred_check
          %p2009 = pneg %p321
        $region86: #{tpu_custom_call.1} parent=59 // pred_check_branch
          %2011 = sbr.rel (%p2009) target = $region88
        $region87: #{tpu_custom_call.1} parent=59 // pred_region
          #allocation18 [shape = 'u32[6]{0}', space=smem, size = 0x18, scoped, tag = 'DMA stride descriptor']
          %s2012 = smul.u32 2, %s42
          %s2014 = ssub.s32 512, 512
          %2015 = vsyncadd %s1953, %s2014
          %s2016 = smul.addr %s41, 16
          %s2017 = sadd.s32 %s2012, %s2016
          %s2018 = smul.addr %s2017, 64
          %s2019 = scalar_lea.hbm %s11, %s2018
          %s2021 = sshll.u32 1, 14
          %s2022 = sxor.u32 4294967295, %s2021
          %s2025 = sshll.u32 7, 18
          %s2026 = sxor.u32 4294967295, %s2025
          %s2027 = sand.u32 0, %s2026
          %s2029 = sor.u32 %s2027, 0
          %s2031 = sshll.u32 3, 24
          %s2032 = sxor.u32 4294967295, %s2031
          %s2033 = sand.u32 %s2029, %s2032
          %s2035 = sor.u32 %s2033, 0
          %s2036 = sshll.u32 %s1956, 4
          %s2037 = int_to_ptr.vmem [resolvable:$true] %s2036
          %2043 = sst [smem:[#allocation18]] 128
          %s2044 = scalar_lea.smem [#allocation18], 1
          %2045 = sst [smem:[%s2044]] 256
          %s2046 = scalar_lea.smem [#allocation18], 2
          %2047 = sst [smem:[%s2046]] 2
          %s2048 = scalar_lea.smem [#allocation18], 3
          %2049 = sst [smem:[%s2048]] 64
          %s2050 = scalar_lea.smem [#allocation18], 4
          %2051 = sst [smem:[%s2050]] 64
          %s2052 = scalar_lea.smem [#allocation18], 5
          %2053 = sst [smem:[%s2052]] 4
          %2055 = dma.general %s2037, 512, %s2019, %s1953, [#allocation17], [#allocation18], %s2035, 0
        $region88: #{tpu_custom_call.1} parent=59 // pred_fallthru
          _
        // Predicated region
        $region89: #{tpu_custom_call.1} parent=59 // pred_check
          %p2056 = pneg %p349
        $region90: #{tpu_custom_call.1} parent=59 // pred_check_branch
          %2058 = sbr.rel (%p2056) target = $region92
        $region91: #{tpu_custom_call.1} parent=59 // pred_region
          #allocation20 [shape = 'u32[6]{0}', space=smem, size = 0x18, scoped, tag = 'DMA stride descriptor']
          %s2059 = smul.u32 2, %s42
          %s2061 = ssub.s32 512, 512
          %2062 = vsyncadd %s1958, %s2061
          %s2063 = smul.addr %s41, 16
          %s2064 = sadd.s32 %s2059, %s2063
          %s2065 = smul.addr %s2064, 64
          %s2066 = scalar_lea.hbm %s12, %s2065
          %s2068 = sshll.u32 1, 14
          %s2069 = sxor.u32 4294967295, %s2068
          %s2072 = sshll.u32 7, 18
          %s2073 = sxor.u32 4294967295, %s2072
          %s2074 = sand.u32 0, %s2073
          %s2076 = sor.u32 %s2074, 0
          %s2078 = sshll.u32 3, 24
          %s2079 = sxor.u32 4294967295, %s2078
          %s2080 = sand.u32 %s2076, %s2079
          %s2082 = sor.u32 %s2080, 0
          %s2083 = sshll.u32 %s1961, 4
          %s2084 = int_to_ptr.vmem [resolvable:$true] %s2083
          %2090 = sst [smem:[#allocation20]] 128
          %s2091 = scalar_lea.smem [#allocation20], 1
          %2092 = sst [smem:[%s2091]] 256
          %s2093 = scalar_lea.smem [#allocation20], 2
          %2094 = sst [smem:[%s2093]] 2
          %s2095 = scalar_lea.smem [#allocation20], 3
          %2096 = sst [smem:[%s2095]] 64
          %s2097 = scalar_lea.smem [#allocation20], 4
          %2098 = sst [smem:[%s2097]] 64
          %s2099 = scalar_lea.smem [#allocation20], 5
          %2100 = sst [smem:[%s2099]] 4
          %2102 = dma.general %s2084, 512, %s2066, %s1958, [#allocation19], [#allocation20], %s2082, 0
        $region92: #{tpu_custom_call.1} parent=59 // pred_fallthru
          _
      $region60: #{tpu_custom_call.1} parent=5 // pred_fallthru
        _
      %p2103 = scmp.le.s32.totalorder 2, %s32
      // Predicated region
      $region93: #{tpu_custom_call.1} parent=5 // pred_check
        %p2104 = pneg %p2103
      $region94: #{tpu_custom_call.1} parent=5 // pred_check_branch
        %2106 = sbr.rel (%p2104) target = $region96
      $region95: #{tpu_custom_call.1} parent=5 // pred_region
        %s2107 = ssub.s32 %s32, 2
        // Predicated region
        $region97: #{tpu_custom_call.1} parent=95 // pred_check
          %p2108 = pneg %p299
        $region98: #{tpu_custom_call.1} parent=95 // pred_check_branch
          %2110 = sbr.rel (%p2108) target = $region100
        $region99: #{tpu_custom_call.1} parent=95 // pred_region
          %s2111 = sand.u32 %s284, 1
          %s2112 = scalar_lea.sflag [#allocation4], %s2111
          %s2113 = sand.u32 %s284, 1
          %s2114 = smul.addr %s2113, 32
          %s2115 = scalar_lea.vmem [#allocation11], %s2114
          %2116 = dma.done %s2112, 512
        $region100: #{tpu_custom_call.1} parent=95 // pred_fallthru
          _
        // Predicated region
        $region101: #{tpu_custom_call.1} parent=95 // pred_check
          %p2117 = pneg %p327
        $region102: #{tpu_custom_call.1} parent=95 // pred_check_branch
          %2119 = sbr.rel (%p2117) target = $region104
        $region103: #{tpu_custom_call.1} parent=95 // pred_region
          %s2120 = sand.u32 %s38, 1
          %s2121 = scalar_lea.sflag [#allocation13], %s2120
          %s2122 = sand.u32 %s312, 1
          %s2123 = smul.addr %s2122, 32
          %s2124 = scalar_lea.vmem [#allocation12], %s2123
          %2125 = dma.done %s2121, 512
        $region104: #{tpu_custom_call.1} parent=95 // pred_fallthru
          _
        // Predicated region
        $region105: #{tpu_custom_call.1} parent=95 // pred_check
          %p2126 = pneg %p355
        $region106: #{tpu_custom_call.1} parent=95 // pred_check_branch
          %2128 = sbr.rel (%p2126) target = $region108
        $region107: #{tpu_custom_call.1} parent=95 // pred_region
          %s2129 = sand.u32 %s38, 1
          %s2130 = scalar_lea.sflag [#allocation13], %s2129
          %s2131 = sand.u32 %s340, 1
          %s2132 = smul.addr %s2131, 32
          %s2133 = scalar_lea.vmem [#allocation14], %s2132
          %2134 = dma.done %s2130, 512
        $region108: #{tpu_custom_call.1} parent=95 // pred_fallthru
          _
      $region96: #{tpu_custom_call.1} parent=5 // pred_fallthru
        _
    $region6: #{tpu_custom_call.1} parent=1 // loop_footer
      %s36 = sadd.s32 1, %s32
    $region7: #{tpu_custom_call.1} parent=1 // loop_footer_branch
      %31 = sbr.rel target = $region3
    $region8: #{tpu_custom_call.1} parent=1 // loop_exit
      _
    %2135 = vsyncpa [#allocation3], 1
    %s2136 = scalar_lea.sflag [#allocation3], 1
    %2137 = vsyncpa %s2136, 1
    %2138 = vsyncpa [#allocation6], 1
    %s2139 = scalar_lea.sflag [#allocation6], 1
    %2140 = vsyncpa %s2139, 1
    %2141 = vsyncpa [#allocation9], 1
    %2142 = vsyncpa [#allocation4], 1
    %s2143 = scalar_lea.sflag [#allocation4], 1
    %2144 = vsyncpa %s2143, 1
    %2145 = vsyncpa [#allocation13], 1
    %s2146 = scalar_lea.sflag [#allocation13], 1
    %2147 = vsyncpa %s2146, 1

</llo_original>
